<compile_context>
chip_gen: v7x
topology: tpu7x:2x2x1
jax: 0.10.0
libtpu: 0.0.40
codegen_flags: <defaults>
</compile_context>

<pallas_src>
import functools

import jax
import jax.numpy as jnp
from jax.experimental import pallas as pl
from jax.experimental.pallas import tpu as pltpu


# ----------------------------- helpers ------------------------------------- #

def _round_up(n, m):
    return ((n + m - 1) // m) * m


def _pad2(a, rows, cols):
    pr, pc = rows - a.shape[0], cols - a.shape[1]
    if pr == 0 and pc == 0:
        return a
    return jnp.pad(a, ((0, pr), (0, pc)))


def _pick_stream_tile(kp, h1, max_dbuf_bytes=14 << 20):
    """Largest multiple-of-128 divisor of kp (with >= 2 grid steps) whose
    double-buffered bf16 weight tile (tile x h1) fits under max_dbuf_bytes."""
    for t in range(kp, 0, -128):
        if kp % t:
            continue
        if kp // t < 2:
            continue
        if t * h1 * 2 * 2 <= max_dbuf_bytes:   # bf16 * double buffer
            return t
    return kp   # tiny case: single block


def _leaky_relu_05(v):
    # nn.LeakyReLU(0.5)
    return jnp.where(v >= 0.0, v, 0.5 * v)


def _lin(h_f32, w_ref, b_ref):
    # bf16 operands into the MXU, f32 accumulation, f32 bias add.
    return jnp.dot(h_f32.astype(jnp.bfloat16), w_ref[...],
                   preferred_element_type=jnp.float32) + b_ref[...]


# ----------------------------- kernel -------------------------------------- #

def _vae2_fused_kernel(
    nk,
    # inputs
    x_ref, w1_ref, b1_ref, m1_ref,
    w2_ref, b2_ref, m2_ref,
    w3_ref, b3_ref, m3_ref,
    w4mu_ref, b4mu_ref, w4lv_ref, b4lv_ref,
    eps_ref,
    wd1_ref, bd1_ref, wd2_ref, bd2_ref, wd3_ref, bd3_ref,
    wd4_ref, bd4_ref,
    # outputs
    mu_ref, logvar_ref, recon_ref,
    # scratch
    acc_ref, d3_ref,
):
    k = pl.program_id(0)

    @pl.when(k == 0)
    def _():
        acc_ref[...] = jnp.zeros_like(acc_ref)

    # ----- phase 1 (k < nk): stream K-tiles of the big first matmul ---------
    @pl.when(k < nk)
    def _():
        acc_ref[...] += jnp.dot(x_ref[...], w1_ref[...],
                                preferred_element_type=jnp.float32)

    # ----- epilogue on the last K step: small layers stay resident ----------
    @pl.when(k == nk - 1)
    def _():
        h1 = _leaky_relu_05(acc_ref[...] + b1_ref[...]) * m1_ref[...]   # Dropout(0.5)
        h2 = _leaky_relu_05(_lin(h1, w2_ref, b2_ref)) * m2_ref[...]
        h3 = _leaky_relu_05(_lin(h2, w3_ref, b3_ref)) * m3_ref[...]

        # two lane-aligned heads instead of slicing a 2*z_dim output
        mu = _lin(h3, w4mu_ref, b4mu_ref)
        logvar = _lin(h3, w4lv_ref, b4lv_ref)

        # reparameterize
        std = jnp.exp(0.5 * logvar)
        z = mu + std * eps_ref[...]

        # decoder hidden layers (ReLU)
        d1 = jnp.maximum(_lin(z, wd1_ref, bd1_ref), 0.0)
        d2 = jnp.maximum(_lin(d1, wd2_ref, bd2_ref), 0.0)
        d3 = jnp.maximum(_lin(d2, wd3_ref, bd3_ref), 0.0)

        mu_ref[...] = mu
        logvar_ref[...] = logvar
        d3_ref[...] = d3.astype(d3_ref.dtype)   # stays in VMEM scratch

    # ----- phase 2 (k >= nk): stream N-tiles of the big final layer ---------
    @pl.when(k >= nk)
    def _():
        logits = jnp.dot(d3_ref[...], wd4_ref[...],
                         preferred_element_type=jnp.float32) + bd4_ref[...]
        recon_ref[...] = jax.nn.sigmoid(logits)


# ----------------------------- param prep (once) ---------------------------- #

def prepare_vae2_params(params, z_dim):
    """Pad + cast weights ONCE (init time). Returns (dims, padded_weights)."""
    (w1, b1, w2, b2, w3, b3, w4, b4,
     wd1, bd1, wd2, bd2, wd3, bd3, wd4, bd4) = params
    image_size, h1_dim = w1.shape
    h2_dim, h3_dim = w2.shape[1], w3.shape[1]

    Kp = _round_up(image_size, 128)
    H1 = _round_up(h1_dim, 128)
    H2 = _round_up(h2_dim, 128)
    H3 = _round_up(h3_dim, 128)
    Zp = _round_up(z_dim, 128)

    f32, bf16 = jnp.float32, jnp.bfloat16

    def W(w, kp, np_):
        return _pad2(jnp.asarray(w, f32), kp, np_).astype(bf16)

    def Bv(b, np_):
        return _pad2(jnp.asarray(b, f32).reshape(1, -1), 1, np_)

    b4_flat = jnp.asarray(b4, f32).reshape(-1)
    padded = dict(
        w1=W(w1, Kp, H1), b1=Bv(b1, H1),
        w2=W(w2, H1, H2), b2=Bv(b2, H2),
        w3=W(w3, H2, H3), b3=Bv(b3, H3),
        # split final encoder layer into [mu | logvar] heads (torch.chunk order)
        w4mu=W(w4[:, :z_dim], H3, Zp), b4mu=Bv(b4_flat[:z_dim], Zp),
        w4lv=W(w4[:, z_dim:], H3, Zp), b4lv=Bv(b4_flat[z_dim:], Zp),
        wd1=W(wd1, Zp, H3), bd1=Bv(bd1, H3),
        wd2=W(wd2, H3, H2), bd2=Bv(bd2, H2),
        wd3=W(wd3, H2, H1), bd3=Bv(bd3, H1),
        wd4=W(wd4, H1, Kp), bd4=Bv(bd4, Kp),
    )
    dims = dict(image_size=image_size, h1=h1_dim, h2=h2_dim, h3=h3_dim,
                z_dim=z_dim, Kp=Kp, H1=H1, H2=H2, H3=H3, Zp=Zp)
    return dims, padded


# ----------------------------- forward wrapper ------------------------------ #

def vae2_forward(x, eps, masks, dims, padded):
    """x: (B, image_size) f32. eps: (B, z_dim) f32. masks: pre-scaled dropout masks."""
    B = x.shape[0]
    image_size, z_dim = dims["image_size"], dims["z_dim"]
    Kp, H1, H2, H3, Zp = dims["Kp"], dims["H1"], dims["H2"], dims["H3"], dims["Zp"]
    m1, m2, m3 = masks

    f32, bf16 = jnp.float32, jnp.bfloat16
    Bp = _round_up(B, 8)

    # per-call (data) padding only — weights are pre-padded
    x_p = _pad2(x.astype(f32), Bp, Kp).astype(bf16)
    eps_p = _pad2(eps.astype(f32), Bp, Zp)
    m1_p = _pad2(m1.astype(f32), Bp, H1)
    m2_p = _pad2(m2.astype(f32), Bp, H2)
    m3_p = _pad2(m3.astype(f32), Bp, H3)

    t = _pick_stream_tile(Kp, H1)      # same tile width for W1 K-stream and Wd4 N-stream
    nk = Kp // t                       # K-steps (W1)
    nn_ = Kp // t                      # N-steps (Wd4)
    nsteps = nk + nn_
    last_k = nk - 1

    full = lambda shape: pl.BlockSpec(shape, lambda k: (0, 0))

    in_specs = [
        pl.BlockSpec((Bp, t), lambda k: (0, jnp.minimum(k, last_k))),    # x K-tile
        pl.BlockSpec((t, H1), lambda k: (jnp.minimum(k, last_k), 0)),    # W1 K-tile (streamed)
        full((1, H1)), full((Bp, H1)),                                   # b1, m1
        full((H1, H2)), full((1, H2)), full((Bp, H2)),                   # w2, b2, m2
        full((H2, H3)), full((1, H3)), full((Bp, H3)),                   # w3, b3, m3
        full((H3, Zp)), full((1, Zp)),                                   # w4_mu, b4_mu
        full((H3, Zp)), full((1, Zp)),                                   # w4_logvar, b4_logvar
        full((Bp, Zp)),                                                  # eps
        full((Zp, H3)), full((1, H3)),                                   # wd1, bd1
        full((H3, H2)), full((1, H2)),                                   # wd2, bd2
        full((H2, H1)), full((1, H1)),                                   # wd3, bd3
        pl.BlockSpec((H1, t), lambda k: (0, jnp.maximum(k - nk, 0))),    # Wd4 N-tile (streamed)
        pl.BlockSpec((1, t), lambda k: (0, jnp.maximum(k - nk, 0))),     # bd4 N-tile
    ]
    out_specs = (
        pl.BlockSpec((Bp, Zp), lambda k: (0, 0)),                        # mu
        pl.BlockSpec((Bp, Zp), lambda k: (0, 0)),                        # logvar
        pl.BlockSpec((Bp, t), lambda k: (0, jnp.maximum(k - nk, 0))),    # recon N-tile
    )

    kernel = functools.partial(_vae2_fused_kernel, nk)

    mu_p, logvar_p, recon_p = pl.pallas_call(
        kernel,
        out_shape=(
            jax.ShapeDtypeStruct((Bp, Zp), f32),
            jax.ShapeDtypeStruct((Bp, Zp), f32),
            jax.ShapeDtypeStruct((Bp, Kp), f32),
        ),
        grid=(nsteps,),
        in_specs=in_specs,
        out_specs=out_specs,
        scratch_shapes=[pltpu.VMEM((Bp, H1), f32),      # x@W1 accumulator
                        pltpu.VMEM((Bp, H1), bf16)],    # d3 (decoder hidden, resident)
        compiler_params=pltpu.CompilerParams(
            # Sequential grid: accumulation + epilogue + d3 reuse require order.
            dimension_semantics=("arbitrary",),
            # Explicit limit (v5e default scoped VMEM is only 16 MiB); plan is
            # ~2 * 12.6 MiB streaming dbuf + ~6 MiB residents at real sizes.
            vmem_limit_bytes=48 << 20,
        ),
    )(x_p, padded["w1"], padded["b1"], m1_p,
      padded["w2"], padded["b2"], m2_p,
      padded["w3"], padded["b3"], m3_p,
      padded["w4mu"], padded["b4mu"], padded["w4lv"], padded["b4lv"],
      eps_p,
      padded["wd1"], padded["bd1"], padded["wd2"], padded["bd2"],
      padded["wd3"], padded["bd3"],
      padded["wd4"], padded["bd4"])

    return (recon_p[:B, :image_size],
            mu_p[:B, :z_dim],
            logvar_p[:B, :z_dim])


# ----------------------------- demo / check --------------------------------- #

def init_linear(key, fan_in, fan_out):
    """PyTorch nn.Linear-style init; weight returned already transposed to (in, out)."""
    kw, kb = jax.random.split(key)
    bound = 1.0 / jnp.sqrt(jnp.float32(fan_in))
    w = jax.random.uniform(kw, (fan_in, fan_out), jnp.float32, -bound, bound)
    b = jax.random.uniform(kb, (1, fan_out), jnp.float32, -bound, bound)
    return w, b


if __name__ == "__main__":
    # Small, module-consistent (ragged, like 4490/2000/200/20/5) shapes.
    B = 6
    image_size, h1_dim, h2_dim, h3_dim, z_dim = 250, 130, 70, 20, 5

    key = jax.random.PRNGKey(0)
    keys = jax.random.split(key, 16)

    # encoder weights
    w1, b1 = init_linear(keys[0], image_size, h1_dim)
    w2, b2 = init_linear(keys[1], h1_dim, h2_dim)
    w3, b3 = init_linear(keys[2], h2_dim, h3_dim)
    w4, b4 = init_linear(keys[3], h3_dim, 2 * z_dim)
    # decoder weights
    wd1, bd1 = init_linear(keys[4], z_dim, h3_dim)
    wd2, bd2 = init_linear(keys[5], h3_dim, h2_dim)
    wd3, bd3 = init_linear(keys[6], h2_dim, h1_dim)
    wd4, bd4 = init_linear(keys[7], h1_dim, image_size)
    params = (w1, b1, w2, b2, w3, b3, w4, b4,
              wd1, bd1, wd2, bd2, wd3, bd3, wd4, bd4)

    # one-time padding / bf16 cast (NOT in the per-forward path)
    dims, padded = prepare_vae2_params(params, z_dim)
    padded = jax.tree_util.tree_map(jax.block_until_ready, padded)

    # inputs
    x = jax.random.uniform(keys[8], (B, image_size), jnp.float32)
    eps = jax.random.normal(keys[9], (B, z_dim), jnp.float32)      # reparam noise
    # train-mode Dropout(0.5) masks, pre-scaled by 1/(1-p) = 2
    m1 = jax.random.bernoulli(keys[10], 0.5, (B, h1_dim)).astype(jnp.float32) * 2.0
    m2 = jax.random.bernoulli(keys[11], 0.5, (B, h2_dim)).astype(jnp.float32) * 2.0
    m3 = jax.random.bernoulli(keys[12], 0.5, (B, h3_dim)).astype(jnp.float32) * 2.0

    recon, mu, logvar = vae2_forward(x, eps, (m1, m2, m3), dims, padded)
    jax.block_until_ready((recon, mu, logvar))

    # reference check in plain JAX with the same bf16-weight / f32-accum numerics
    def ref_forward(xv):
        bf = lambda a: a.astype(jnp.bfloat16)
        lin = lambda h, w, b: jnp.dot(bf(h), bf(w),
                                      preferred_element_type=jnp.float32) + b
        lrelu = lambda v: jnp.where(v >= 0, v, 0.5 * v)
        h = lrelu(lin(xv, w1, b1)) * m1
        h = lrelu(lin(h, w2, b2)) * m2
        h = lrelu(lin(h, w3, b3)) * m3
        mu_r = lin(h, w4[:, :z_dim], b4[:, :z_dim])
        lv_r = lin(h, w4[:, z_dim:], b4[:, z_dim:])
        z = mu_r + jnp.exp(0.5 * lv_r) * eps
        d = jnp.maximum(lin(z, wd1, bd1), 0.0)
        d = jnp.maximum(lin(d, wd2, bd2), 0.0)
        d = jnp.maximum(lin(d, wd3, bd3), 0.0)
        return jax.nn.sigmoid(lin(d, wd4, bd4)), mu_r, lv_r

    r_ref, mu_ref_v, lv_ref_v = ref_forward(x)
    assert recon.shape == (B, image_size) and mu.shape == (B, z_dim)
    assert jnp.allclose(recon, r_ref, atol=1e-2, rtol=1e-2), "recon mismatch"
    assert jnp.allclose(mu, mu_ref_v, atol=1e-2, rtol=1e-2), "mu mismatch"
    assert jnp.allclose(logvar, lv_ref_v, atol=1e-2, rtol=1e-2), "logvar mismatch"

    print("KERNEL_OK")
</pallas_src>

<mosaic_0001>
module attributes {stable_mosaic.version = 11 : i64} {
  func.func @_vae2_fused_kernel(%arg0: i32, %arg1: memref<8x128xbf16, #tpu.memory_space<vmem>>, %arg2: memref<128x256xbf16, #tpu.memory_space<vmem>>, %arg3: memref<1x256xf32, #tpu.memory_space<vmem>>, %arg4: memref<8x256xf32, #tpu.memory_space<vmem>>, %arg5: memref<256x128xbf16, #tpu.memory_space<vmem>>, %arg6: memref<1x128xf32, #tpu.memory_space<vmem>>, %arg7: memref<8x128xf32, #tpu.memory_space<vmem>>, %arg8: memref<128x128xbf16, #tpu.memory_space<vmem>>, %arg9: memref<1x128xf32, #tpu.memory_space<vmem>>, %arg10: memref<8x128xf32, #tpu.memory_space<vmem>>, %arg11: memref<128x128xbf16, #tpu.memory_space<vmem>>, %arg12: memref<1x128xf32, #tpu.memory_space<vmem>>, %arg13: memref<128x128xbf16, #tpu.memory_space<vmem>>, %arg14: memref<1x128xf32, #tpu.memory_space<vmem>>, %arg15: memref<8x128xf32, #tpu.memory_space<vmem>>, %arg16: memref<128x128xbf16, #tpu.memory_space<vmem>>, %arg17: memref<1x128xf32, #tpu.memory_space<vmem>>, %arg18: memref<128x128xbf16, #tpu.memory_space<vmem>>, %arg19: memref<1x128xf32, #tpu.memory_space<vmem>>, %arg20: memref<128x256xbf16, #tpu.memory_space<vmem>>, %arg21: memref<1x256xf32, #tpu.memory_space<vmem>>, %arg22: memref<256x128xbf16, #tpu.memory_space<vmem>>, %arg23: memref<1x128xf32, #tpu.memory_space<vmem>>, %arg24: memref<8x128xf32, #tpu.memory_space<vmem>>, %arg25: memref<8x128xf32, #tpu.memory_space<vmem>>, %arg26: memref<8x128xf32, #tpu.memory_space<vmem>>, %arg27: memref<8x256xf32, #tpu.memory_space<vmem>>, %arg28: memref<8x256xbf16, #tpu.memory_space<vmem>>) attributes {dimension_semantics = [#tpu.dimension_semantics<arbitrary>], iteration_bounds = array<i64: 4>, scalar_prefetch = 0 : i64, scratch_operands = 2 : i64, tpu.core_type = #tpu.core_type<tc>, window_params = [{transform_indices = @transform_0, window_bounds = array<i64: 8, 128>}, {transform_indices = @transform_1, window_bounds = array<i64: 128, 256>}, {pipeline_mode = #tpu.pipeline_mode<synchronous>, transform_indices = @transform_2, window_bounds = array<i64: 1, 256>}, {pipeline_mode = #tpu.pipeline_mode<synchronous>, transform_indices = @transform_3, window_bounds = array<i64: 8, 256>}, {pipeline_mode = #tpu.pipeline_mode<synchronous>, transform_indices = @transform_4, window_bounds = array<i64: 256, 128>}, {pipeline_mode = #tpu.pipeline_mode<synchronous>, transform_indices = @transform_5, window_bounds = array<i64: 1, 128>}, {pipeline_mode = #tpu.pipeline_mode<synchronous>, transform_indices = @transform_6, window_bounds = array<i64: 8, 128>}, {pipeline_mode = #tpu.pipeline_mode<synchronous>, transform_indices = @transform_7, window_bounds = array<i64: 128, 128>}, {pipeline_mode = #tpu.pipeline_mode<synchronous>, transform_indices = @transform_8, window_bounds = array<i64: 1, 128>}, {pipeline_mode = #tpu.pipeline_mode<synchronous>, transform_indices = @transform_9, window_bounds = array<i64: 8, 128>}, {pipeline_mode = #tpu.pipeline_mode<synchronous>, transform_indices = @transform_10, window_bounds = array<i64: 128, 128>}, {pipeline_mode = #tpu.pipeline_mode<synchronous>, transform_indices = @transform_11, window_bounds = array<i64: 1, 128>}, {pipeline_mode = #tpu.pipeline_mode<synchronous>, transform_indices = @transform_12, window_bounds = array<i64: 128, 128>}, {pipeline_mode = #tpu.pipeline_mode<synchronous>, transform_indices = @transform_13, window_bounds = array<i64: 1, 128>}, {pipeline_mode = #tpu.pipeline_mode<synchronous>, transform_indices = @transform_14, window_bounds = array<i64: 8, 128>}, {pipeline_mode = #tpu.pipeline_mode<synchronous>, transform_indices = @transform_15, window_bounds = array<i64: 128, 128>}, {pipeline_mode = #tpu.pipeline_mode<synchronous>, transform_indices = @transform_16, window_bounds = array<i64: 1, 128>}, {pipeline_mode = #tpu.pipeline_mode<synchronous>, transform_indices = @transform_17, window_bounds = array<i64: 128, 128>}, {pipeline_mode = #tpu.pipeline_mode<synchronous>, transform_indices = @transform_18, window_bounds = array<i64: 1, 128>}, {pipeline_mode = #tpu.pipeline_mode<synchronous>, transform_indices = @transform_19, window_bounds = array<i64: 128, 256>}, {pipeline_mode = #tpu.pipeline_mode<synchronous>, transform_indices = @transform_20, window_bounds = array<i64: 1, 256>}, {transform_indices = @transform_21, window_bounds = array<i64: 256, 128>}, {transform_indices = @transform_22, window_bounds = array<i64: 1, 128>}, {pipeline_mode = #tpu.pipeline_mode<synchronous>, transform_indices = @transform_23, window_bounds = array<i64: 8, 128>}, {pipeline_mode = #tpu.pipeline_mode<synchronous>, transform_indices = @transform_24, window_bounds = array<i64: 8, 128>}, {transform_indices = @transform_25, window_bounds = array<i64: 8, 128>}]} {
    %c0_i32 = arith.constant 0 : i32
    %0 = arith.cmpi eq, %arg0, %c0_i32 : i32
    %1 = arith.extui %0 : i1 to i32
    %c0_i32_0 = arith.constant 0 : i32
    %2 = arith.cmpi ne, %1, %c0_i32_0 : i32
    scf.if %2 {
      %cst = arith.constant 0.000000e+00 : f32
      %12 = vector.broadcast %cst : f32 to vector<8x256xf32>
      %c0 = arith.constant 0 : index
      %c0_5 = arith.constant 0 : index
      %13 = vector.load %arg27[%c0, %c0_5] : memref<8x256xf32, #tpu.memory_space<vmem>>, vector<8x256xf32>
      tpu.vector_store %arg27[%c0, %c0_5], %12 {strides = array<i32>} : memref<8x256xf32, #tpu.memory_space<vmem>>, vector<8x256xf32>,
    } else {
    }
    %c2_i32 = arith.constant 2 : i32
    %3 = arith.cmpi slt, %arg0, %c2_i32 : i32
    %4 = arith.extui %3 : i1 to i32
    %c0_i32_1 = arith.constant 0 : i32
    %5 = arith.cmpi ne, %4, %c0_i32_1 : i32
    scf.if %5 {
      %c0 = arith.constant 0 : index
      %c0_5 = arith.constant 0 : index
      %12 = vector.load %arg27[%c0, %c0_5] : memref<8x256xf32, #tpu.memory_space<vmem>>, vector<8x256xf32>
      %c0_6 = arith.constant 0 : index
      %c0_7 = arith.constant 0 : index
      %13 = vector.load %arg1[%c0_6, %c0_7] : memref<8x128xbf16, #tpu.memory_space<vmem>>, vector<8x128xbf16>
      %c0_8 = arith.constant 0 : index
      %c0_9 = arith.constant 0 : index
      %14 = vector.load %arg2[%c0_8, %c0_9] : memref<128x256xbf16, #tpu.memory_space<vmem>>, vector<128x256xbf16>
      %cst = arith.constant dense<0.000000e+00> : vector<8x256xf32>
      %15 = tpu.matmul %13, %14, %cst {dimension_numbers = #tpu.dot_dimension_numbers<[1], [0], [0], [1], [0, 0, 1, 1], [], []>} : vector<8x128xbf16>, vector<128x256xbf16>, vector<8x256xf32> -> vector<8x256xf32>
      %16 = arith.addf %12, %15 : vector<8x256xf32>
      %c0_10 = arith.constant 0 : index
      %c0_11 = arith.constant 0 : index
      %17 = vector.load %arg27[%c0_10, %c0_11] : memref<8x256xf32, #tpu.memory_space<vmem>>, vector<8x256xf32>
      tpu.vector_store %arg27[%c0_10, %c0_11], %16 {strides = array<i32>} : memref<8x256xf32, #tpu.memory_space<vmem>>, vector<8x256xf32>,
    } else {
    }
    %c1_i32 = arith.constant 1 : i32
    %6 = arith.cmpi eq, %arg0, %c1_i32 : i32
    %7 = arith.extui %6 : i1 to i32
    %c0_i32_2 = arith.constant 0 : i32
    %8 = arith.cmpi ne, %7, %c0_i32_2 : i32
    scf.if %8 {
      %c0 = arith.constant 0 : index
      %c0_5 = arith.constant 0 : index
      %12 = vector.load %arg27[%c0, %c0_5] : memref<8x256xf32, #tpu.memory_space<vmem>>, vector<8x256xf32>
      %c0_6 = arith.constant 0 : index
      %c0_7 = arith.constant 0 : index
      %13 = vector.load %arg3[%c0_6, %c0_7] : memref<1x256xf32, #tpu.memory_space<vmem>>, vector<1x256xf32>
      %14 = vector.broadcast %13 : vector<1x256xf32> to vector<8x256xf32>
      %15 = arith.addf %12, %14 : vector<8x256xf32>
      %cst = arith.constant 0.000000e+00 : f32
      %16 = vector.broadcast %cst : f32 to vector<8x256xf32>
      %17 = arith.cmpf oge, %15, %16 : vector<8x256xf32>
      %cst_8 = arith.constant 5.000000e-01 : f32
      %18 = vector.broadcast %cst_8 : f32 to vector<8x256xf32>
      %19 = arith.mulf %18, %15 : vector<8x256xf32>
      %20 = arith.select %17, %15, %19 : vector<8x256xi1>, vector<8x256xf32>
      %c0_9 = arith.constant 0 : index
      %c0_10 = arith.constant 0 : index
      %21 = vector.load %arg4[%c0_9, %c0_10] : memref<8x256xf32, #tpu.memory_space<vmem>>, vector<8x256xf32>
      %22 = arith.mulf %20, %21 : vector<8x256xf32>
      %23 = arith.truncf %22 : vector<8x256xf32> to vector<8x256xbf16>
      %c0_11 = arith.constant 0 : index
      %c0_12 = arith.constant 0 : index
      %24 = vector.load %arg5[%c0_11, %c0_12] : memref<256x128xbf16, #tpu.memory_space<vmem>>, vector<256x128xbf16>
      %cst_13 = arith.constant dense<0.000000e+00> : vector<8x128xf32>
      %25 = tpu.matmul %23, %24, %cst_13 {dimension_numbers = #tpu.dot_dimension_numbers<[1], [0], [0], [1], [0, 0, 1, 1], [], []>} : vector<8x256xbf16>, vector<256x128xbf16>, vector<8x128xf32> -> vector<8x128xf32>
      %c0_14 = arith.constant 0 : index
      %c0_15 = arith.constant 0 : index
      %26 = vector.load %arg6[%c0_14, %c0_15] : memref<1x128xf32, #tpu.memory_space<vmem>>, vector<1x128xf32>
      %27 = vector.broadcast %26 : vector<1x128xf32> to vector<8x128xf32>
      %28 = arith.addf %25, %27 : vector<8x128xf32>
      %cst_16 = arith.constant 0.000000e+00 : f32
      %29 = vector.broadcast %cst_16 : f32 to vector<8x128xf32>
      %30 = arith.cmpf oge, %28, %29 : vector<8x128xf32>
      %cst_17 = arith.constant 5.000000e-01 : f32
      %31 = vector.broadcast %cst_17 : f32 to vector<8x128xf32>
      %32 = arith.mulf %31, %28 : vector<8x128xf32>
      %33 = arith.select %30, %28, %32 : vector<8x128xi1>, vector<8x128xf32>
      %c0_18 = arith.constant 0 : index
      %c0_19 = arith.constant 0 : index
      %34 = vector.load %arg7[%c0_18, %c0_19] : memref<8x128xf32, #tpu.memory_space<vmem>>, vector<8x128xf32>
      %35 = arith.mulf %33, %34 : vector<8x128xf32>
      %36 = arith.truncf %35 : vector<8x128xf32> to vector<8x128xbf16>
      %c0_20 = arith.constant 0 : index
      %c0_21 = arith.constant 0 : index
      %37 = vector.load %arg8[%c0_20, %c0_21] : memref<128x128xbf16, #tpu.memory_space<vmem>>, vector<128x128xbf16>
      %cst_22 = arith.constant dense<0.000000e+00> : vector<8x128xf32>
      %38 = tpu.matmul %36, %37, %cst_22 {dimension_numbers = #tpu.dot_dimension_numbers<[1], [0], [0], [1], [0, 0, 1, 1], [], []>} : vector<8x128xbf16>, vector<128x128xbf16>, vector<8x128xf32> -> vector<8x128xf32>
      %c0_23 = arith.constant 0 : index
      %c0_24 = arith.constant 0 : index
      %39 = vector.load %arg9[%c0_23, %c0_24] : memref<1x128xf32, #tpu.memory_space<vmem>>, vector<1x128xf32>
      %40 = vector.broadcast %39 : vector<1x128xf32> to vector<8x128xf32>
      %41 = arith.addf %38, %40 : vector<8x128xf32>
      %cst_25 = arith.constant 0.000000e+00 : f32
      %42 = vector.broadcast %cst_25 : f32 to vector<8x128xf32>
      %43 = arith.cmpf oge, %41, %42 : vector<8x128xf32>
      %cst_26 = arith.constant 5.000000e-01 : f32
      %44 = vector.broadcast %cst_26 : f32 to vector<8x128xf32>
      %45 = arith.mulf %44, %41 : vector<8x128xf32>
      %46 = arith.select %43, %41, %45 : vector<8x128xi1>, vector<8x128xf32>
      %c0_27 = arith.constant 0 : index
      %c0_28 = arith.constant 0 : index
      %47 = vector.load %arg10[%c0_27, %c0_28] : memref<8x128xf32, #tpu.memory_space<vmem>>, vector<8x128xf32>
      %48 = arith.mulf %46, %47 : vector<8x128xf32>
      %49 = arith.truncf %48 : vector<8x128xf32> to vector<8x128xbf16>
      %c0_29 = arith.constant 0 : index
      %c0_30 = arith.constant 0 : index
      %50 = vector.load %arg11[%c0_29, %c0_30] : memref<128x128xbf16, #tpu.memory_space<vmem>>, vector<128x128xbf16>
      %cst_31 = arith.constant dense<0.000000e+00> : vector<8x128xf32>
      %51 = tpu.matmul %49, %50, %cst_31 {dimension_numbers = #tpu.dot_dimension_numbers<[1], [0], [0], [1], [0, 0, 1, 1], [], []>} : vector<8x128xbf16>, vector<128x128xbf16>, vector<8x128xf32> -> vector<8x128xf32>
      %c0_32 = arith.constant 0 : index
      %c0_33 = arith.constant 0 : index
      %52 = vector.load %arg12[%c0_32, %c0_33] : memref<1x128xf32, #tpu.memory_space<vmem>>, vector<1x128xf32>
      %53 = vector.broadcast %52 : vector<1x128xf32> to vector<8x128xf32>
      %54 = arith.addf %51, %53 : vector<8x128xf32>
      %55 = arith.truncf %48 : vector<8x128xf32> to vector<8x128xbf16>
      %c0_34 = arith.constant 0 : index
      %c0_35 = arith.constant 0 : index
      %56 = vector.load %arg13[%c0_34, %c0_35] : memref<128x128xbf16, #tpu.memory_space<vmem>>, vector<128x128xbf16>
      %cst_36 = arith.constant dense<0.000000e+00> : vector<8x128xf32>
      %57 = tpu.matmul %55, %56, %cst_36 {dimension_numbers = #tpu.dot_dimension_numbers<[1], [0], [0], [1], [0, 0, 1, 1], [], []>} : vector<8x128xbf16>, vector<128x128xbf16>, vector<8x128xf32> -> vector<8x128xf32>
      %c0_37 = arith.constant 0 : index
      %c0_38 = arith.constant 0 : index
      %58 = vector.load %arg14[%c0_37, %c0_38] : memref<1x128xf32, #tpu.memory_space<vmem>>, vector<1x128xf32>
      %59 = vector.broadcast %58 : vector<1x128xf32> to vector<8x128xf32>
      %60 = arith.addf %57, %59 : vector<8x128xf32>
      %cst_39 = arith.constant 5.000000e-01 : f32
      %61 = vector.broadcast %cst_39 : f32 to vector<8x128xf32>
      %62 = arith.mulf %61, %60 : vector<8x128xf32>
      %63 = math.exp %62 : vector<8x128xf32>
      %c0_40 = arith.constant 0 : index
      %c0_41 = arith.constant 0 : index
      %64 = vector.load %arg15[%c0_40, %c0_41] : memref<8x128xf32, #tpu.memory_space<vmem>>, vector<8x128xf32>
      %65 = arith.mulf %63, %64 : vector<8x128xf32>
      %66 = arith.addf %54, %65 : vector<8x128xf32>
      %67 = arith.truncf %66 : vector<8x128xf32> to vector<8x128xbf16>
      %c0_42 = arith.constant 0 : index
      %c0_43 = arith.constant 0 : index
      %68 = vector.load %arg16[%c0_42, %c0_43] : memref<128x128xbf16, #tpu.memory_space<vmem>>, vector<128x128xbf16>
      %cst_44 = arith.constant dense<0.000000e+00> : vector<8x128xf32>
      %69 = tpu.matmul %67, %68, %cst_44 {dimension_numbers = #tpu.dot_dimension_numbers<[1], [0], [0], [1], [0, 0, 1, 1], [], []>} : vector<8x128xbf16>, vector<128x128xbf16>, vector<8x128xf32> -> vector<8x128xf32>
      %c0_45 = arith.constant 0 : index
      %c0_46 = arith.constant 0 : index
      %70 = vector.load %arg17[%c0_45, %c0_46] : memref<1x128xf32, #tpu.memory_space<vmem>>, vector<1x128xf32>
      %71 = vector.broadcast %70 : vector<1x128xf32> to vector<8x128xf32>
      %72 = arith.addf %69, %71 : vector<8x128xf32>
      %cst_47 = arith.constant 0.000000e+00 : f32
      %73 = vector.broadcast %cst_47 : f32 to vector<8x128xf32>
      %74 = arith.maximumf %72, %73 : vector<8x128xf32>
      %75 = arith.truncf %74 : vector<8x128xf32> to vector<8x128xbf16>
      %c0_48 = arith.constant 0 : index
      %c0_49 = arith.constant 0 : index
      %76 = vector.load %arg18[%c0_48, %c0_49] : memref<128x128xbf16, #tpu.memory_space<vmem>>, vector<128x128xbf16>
      %cst_50 = arith.constant dense<0.000000e+00> : vector<8x128xf32>
      %77 = tpu.matmul %75, %76, %cst_50 {dimension_numbers = #tpu.dot_dimension_numbers<[1], [0], [0], [1], [0, 0, 1, 1], [], []>} : vector<8x128xbf16>, vector<128x128xbf16>, vector<8x128xf32> -> vector<8x128xf32>
      %c0_51 = arith.constant 0 : index
      %c0_52 = arith.constant 0 : index
      %78 = vector.load %arg19[%c0_51, %c0_52] : memref<1x128xf32, #tpu.memory_space<vmem>>, vector<1x128xf32>
      %79 = vector.broadcast %78 : vector<1x128xf32> to vector<8x128xf32>
      %80 = arith.addf %77, %79 : vector<8x128xf32>
      %cst_53 = arith.constant 0.000000e+00 : f32
      %81 = vector.broadcast %cst_53 : f32 to vector<8x128xf32>
      %82 = arith.maximumf %80, %81 : vector<8x128xf32>
      %83 = arith.truncf %82 : vector<8x128xf32> to vector<8x128xbf16>
      %c0_54 = arith.constant 0 : index
      %c0_55 = arith.constant 0 : index
      %84 = vector.load %arg20[%c0_54, %c0_55] : memref<128x256xbf16, #tpu.memory_space<vmem>>, vector<128x256xbf16>
      %cst_56 = arith.constant dense<0.000000e+00> : vector<8x256xf32>
      %85 = tpu.matmul %83, %84, %cst_56 {dimension_numbers = #tpu.dot_dimension_numbers<[1], [0], [0], [1], [0, 0, 1, 1], [], []>} : vector<8x128xbf16>, vector<128x256xbf16>, vector<8x256xf32> -> vector<8x256xf32>
      %c0_57 = arith.constant 0 : index
      %c0_58 = arith.constant 0 : index
      %86 = vector.load %arg21[%c0_57, %c0_58] : memref<1x256xf32, #tpu.memory_space<vmem>>, vector<1x256xf32>
      %87 = vector.broadcast %86 : vector<1x256xf32> to vector<8x256xf32>
      %88 = arith.addf %85, %87 : vector<8x256xf32>
      %cst_59 = arith.constant 0.000000e+00 : f32
      %89 = vector.broadcast %cst_59 : f32 to vector<8x256xf32>
      %90 = arith.maximumf %88, %89 : vector<8x256xf32>
      %c0_60 = arith.constant 0 : index
      %c0_61 = arith.constant 0 : index
      %91 = vector.load %arg24[%c0_60, %c0_61] : memref<8x128xf32, #tpu.memory_space<vmem>>, vector<8x128xf32>
      tpu.vector_store %arg24[%c0_60, %c0_61], %54 {strides = array<i32>} : memref<8x128xf32, #tpu.memory_space<vmem>>, vector<8x128xf32>,
      %c0_62 = arith.constant 0 : index
      %c0_63 = arith.constant 0 : index
      %92 = vector.load %arg25[%c0_62, %c0_63] : memref<8x128xf32, #tpu.memory_space<vmem>>, vector<8x128xf32>
      tpu.vector_store %arg25[%c0_62, %c0_63], %60 {strides = array<i32>} : memref<8x128xf32, #tpu.memory_space<vmem>>, vector<8x128xf32>,
      %93 = arith.truncf %90 : vector<8x256xf32> to vector<8x256xbf16>
      %c0_64 = arith.constant 0 : index
      %c0_65 = arith.constant 0 : index
      %94 = vector.load %arg28[%c0_64, %c0_65] : memref<8x256xbf16, #tpu.memory_space<vmem>>, vector<8x256xbf16>
      tpu.vector_store %arg28[%c0_64, %c0_65], %93 {strides = array<i32>} : memref<8x256xbf16, #tpu.memory_space<vmem>>, vector<8x256xbf16>,
    } else {
    }
    %c2_i32_3 = arith.constant 2 : i32
    %9 = arith.cmpi sge, %arg0, %c2_i32_3 : i32
    %10 = arith.extui %9 : i1 to i32
    %c0_i32_4 = arith.constant 0 : i32
    %11 = arith.cmpi ne, %10, %c0_i32_4 : i32
    scf.if %11 {
      %c0 = arith.constant 0 : index
      %c0_5 = arith.constant 0 : index
      %12 = vector.load %arg28[%c0, %c0_5] : memref<8x256xbf16, #tpu.memory_space<vmem>>, vector<8x256xbf16>
      %c0_6 = arith.constant 0 : index
      %c0_7 = arith.constant 0 : index
      %13 = vector.load %arg22[%c0_6, %c0_7] : memref<256x128xbf16, #tpu.memory_space<vmem>>, vector<256x128xbf16>
      %cst = arith.constant dense<0.000000e+00> : vector<8x128xf32>
      %14 = tpu.matmul %12, %13, %cst {dimension_numbers = #tpu.dot_dimension_numbers<[1], [0], [0], [1], [0, 0, 1, 1], [], []>} : vector<8x256xbf16>, vector<256x128xbf16>, vector<8x128xf32> -> vector<8x128xf32>
      %c0_8 = arith.constant 0 : index
      %c0_9 = arith.constant 0 : index
      %15 = vector.load %arg23[%c0_8, %c0_9] : memref<1x128xf32, #tpu.memory_space<vmem>>, vector<1x128xf32>
      %16 = vector.broadcast %15 : vector<1x128xf32> to vector<8x128xf32>
      %17 = arith.addf %14, %16 : vector<8x128xf32>
      %18 = arith.negf %17 : vector<8x128xf32>
      %19 = math.exp %18 : vector<8x128xf32>
      %cst_10 = arith.constant 1.000000e+00 : f32
      %20 = vector.broadcast %cst_10 : f32 to vector<8x128xf32>
      %21 = arith.addf %20, %19 : vector<8x128xf32>
      %22 = arith.divf %20, %21 : vector<8x128xf32>
      %c0_11 = arith.constant 0 : index
      %c0_12 = arith.constant 0 : index
      %23 = vector.load %arg26[%c0_11, %c0_12] : memref<8x128xf32, #tpu.memory_space<vmem>>, vector<8x128xf32>
      tpu.vector_store %arg26[%c0_11, %c0_12], %22 {strides = array<i32>} : memref<8x128xf32, #tpu.memory_space<vmem>>, vector<8x128xf32>,
    } else {
    }
    return
  }
  func.func @transform_0(%arg0: i32) -> (i32, i32) {
    %c1_i32 = arith.constant 1 : i32
    %0 = arith.minsi %arg0, %c1_i32 : i32
    %c0_i32 = arith.constant 0 : i32
    %c0_i32_0 = arith.constant 0 : i32
    return %c0_i32, %0 : i32, i32
  }
  func.func @transform_1(%arg0: i32) -> (i32, i32) {
    %c1_i32 = arith.constant 1 : i32
    %0 = arith.minsi %arg0, %c1_i32 : i32
    %c0_i32 = arith.constant 0 : i32
    %c0_i32_0 = arith.constant 0 : i32
    return %0, %c0_i32 : i32, i32
  }
  func.func @transform_2(%arg0: i32) -> (i32, i32) {
    %c0_i32 = arith.constant 0 : i32
    %c0_i32_0 = arith.constant 0 : i32
    %c0_i32_1 = arith.constant 0 : i32
    return %c0_i32, %c0_i32_0 : i32, i32
  }
  func.func @transform_3(%arg0: i32) -> (i32, i32) {
    %c0_i32 = arith.constant 0 : i32
    %c0_i32_0 = arith.constant 0 : i32
    %c0_i32_1 = arith.constant 0 : i32
    return %c0_i32, %c0_i32_0 : i32, i32
  }
  func.func @transform_4(%arg0: i32) -> (i32, i32) {
    %c0_i32 = arith.constant 0 : i32
    %c0_i32_0 = arith.constant 0 : i32
    %c0_i32_1 = arith.constant 0 : i32
    return %c0_i32, %c0_i32_0 : i32, i32
  }
  func.func @transform_5(%arg0: i32) -> (i32, i32) {
    %c0_i32 = arith.constant 0 : i32
    %c0_i32_0 = arith.constant 0 : i32
    %c0_i32_1 = arith.constant 0 : i32
    return %c0_i32, %c0_i32_0 : i32, i32
  }
  func.func @transform_6(%arg0: i32) -> (i32, i32) {
    %c0_i32 = arith.constant 0 : i32
    %c0_i32_0 = arith.constant 0 : i32
    %c0_i32_1 = arith.constant 0 : i32
    return %c0_i32, %c0_i32_0 : i32, i32
  }
  func.func @transform_7(%arg0: i32) -> (i32, i32) {
    %c0_i32 = arith.constant 0 : i32
    %c0_i32_0 = arith.constant 0 : i32
    %c0_i32_1 = arith.constant 0 : i32
    return %c0_i32, %c0_i32_0 : i32, i32
  }
  func.func @transform_8(%arg0: i32) -> (i32, i32) {
    %c0_i32 = arith.constant 0 : i32
    %c0_i32_0 = arith.constant 0 : i32
    %c0_i32_1 = arith.constant 0 : i32
    return %c0_i32, %c0_i32_0 : i32, i32
  }
  func.func @transform_9(%arg0: i32) -> (i32, i32) {
    %c0_i32 = arith.constant 0 : i32
    %c0_i32_0 = arith.constant 0 : i32
    %c0_i32_1 = arith.constant 0 : i32
    return %c0_i32, %c0_i32_0 : i32, i32
  }
  func.func @transform_10(%arg0: i32) -> (i32, i32) {
    %c0_i32 = arith.constant 0 : i32
    %c0_i32_0 = arith.constant 0 : i32
    %c0_i32_1 = arith.constant 0 : i32
    return %c0_i32, %c0_i32_0 : i32, i32
  }
  func.func @transform_11(%arg0: i32) -> (i32, i32) {
    %c0_i32 = arith.constant 0 : i32
    %c0_i32_0 = arith.constant 0 : i32
    %c0_i32_1 = arith.constant 0 : i32
    return %c0_i32, %c0_i32_0 : i32, i32
  }
  func.func @transform_12(%arg0: i32) -> (i32, i32) {
    %c0_i32 = arith.constant 0 : i32
    %c0_i32_0 = arith.constant 0 : i32
    %c0_i32_1 = arith.constant 0 : i32
    return %c0_i32, %c0_i32_0 : i32, i32
  }
  func.func @transform_13(%arg0: i32) -> (i32, i32) {
    %c0_i32 = arith.constant 0 : i32
    %c0_i32_0 = arith.constant 0 : i32
    %c0_i32_1 = arith.constant 0 : i32
    return %c0_i32, %c0_i32_0 : i32, i32
  }
  func.func @transform_14(%arg0: i32) -> (i32, i32) {
    %c0_i32 = arith.constant 0 : i32
    %c0_i32_0 = arith.constant 0 : i32
    %c0_i32_1 = arith.constant 0 : i32
    return %c0_i32, %c0_i32_0 : i32, i32
  }
  func.func @transform_15(%arg0: i32) -> (i32, i32) {
    %c0_i32 = arith.constant 0 : i32
    %c0_i32_0 = arith.constant 0 : i32
    %c0_i32_1 = arith.constant 0 : i32
    return %c0_i32, %c0_i32_0 : i32, i32
  }
  func.func @transform_16(%arg0: i32) -> (i32, i32) {
    %c0_i32 = arith.constant 0 : i32
    %c0_i32_0 = arith.constant 0 : i32
    %c0_i32_1 = arith.constant 0 : i32
    return %c0_i32, %c0_i32_0 : i32, i32
  }
  func.func @transform_17(%arg0: i32) -> (i32, i32) {
    %c0_i32 = arith.constant 0 : i32
    %c0_i32_0 = arith.constant 0 : i32
    %c0_i32_1 = arith.constant 0 : i32
    return %c0_i32, %c0_i32_0 : i32, i32
  }
  func.func @transform_18(%arg0: i32) -> (i32, i32) {
    %c0_i32 = arith.constant 0 : i32
    %c0_i32_0 = arith.constant 0 : i32
    %c0_i32_1 = arith.constant 0 : i32
    return %c0_i32, %c0_i32_0 : i32, i32
  }
  func.func @transform_19(%arg0: i32) -> (i32, i32) {
    %c0_i32 = arith.constant 0 : i32
    %c0_i32_0 = arith.constant 0 : i32
    %c0_i32_1 = arith.constant 0 : i32
    return %c0_i32, %c0_i32_0 : i32, i32
  }
  func.func @transform_20(%arg0: i32) -> (i32, i32) {
    %c0_i32 = arith.constant 0 : i32
    %c0_i32_0 = arith.constant 0 : i32
    %c0_i32_1 = arith.constant 0 : i32
    return %c0_i32, %c0_i32_0 : i32, i32
  }
  func.func @transform_21(%arg0: i32) -> (i32, i32) {
    %c2_i32 = arith.constant 2 : i32
    %0 = arith.subi %arg0, %c2_i32 : i32
    %c0_i32 = arith.constant 0 : i32
    %1 = arith.maxsi %0, %c0_i32 : i32
    %c0_i32_0 = arith.constant 0 : i32
    %c0_i32_1 = arith.constant 0 : i32
    return %c0_i32_0, %1 : i32, i32
  }
  func.func @transform_22(%arg0: i32) -> (i32, i32) {
    %c2_i32 = arith.constant 2 : i32
    %0 = arith.subi %arg0, %c2_i32 : i32
    %c0_i32 = arith.constant 0 : i32
    %1 = arith.maxsi %0, %c0_i32 : i32
    %c0_i32_0 = arith.constant 0 : i32
    %c0_i32_1 = arith.constant 0 : i32
    return %c0_i32_0, %1 : i32, i32
  }
  func.func @transform_23(%arg0: i32) -> (i32, i32) {
    %c0_i32 = arith.constant 0 : i32
    %c0_i32_0 = arith.constant 0 : i32
    %c0_i32_1 = arith.constant 0 : i32
    return %c0_i32, %c0_i32_0 : i32, i32
  }
  func.func @transform_24(%arg0: i32) -> (i32, i32) {
    %c0_i32 = arith.constant 0 : i32
    %c0_i32_0 = arith.constant 0 : i32
    %c0_i32_1 = arith.constant 0 : i32
    return %c0_i32, %c0_i32_0 : i32, i32
  }
  func.func @transform_25(%arg0: i32) -> (i32, i32) {
    %c2_i32 = arith.constant 2 : i32
    %0 = arith.subi %arg0, %c2_i32 : i32
    %c0_i32 = arith.constant 0 : i32
    %1 = arith.maxsi %0, %c0_i32 : i32
    %c0_i32_0 = arith.constant 0 : i32
    %c0_i32_1 = arith.constant 0 : i32
    return %c0_i32_0, %1 : i32, i32
  }
}

</mosaic_0001>

<llo_original>
// kernel: tpu_custom_call.1
$region0: #{tpu_custom_call.1}
  #allocation0 [shape = 'u32[]', space=smem, size = 0x4, offset = 0x4, fixed_abs, tag = 'smem constant byte address 0x4 - core index']
  #allocation1 [shape = 'u32[144,128]{1,0:T(1,128)}', space=vmem, size = 0x12000, scoped, tag = 'internal scratch']
  #allocation2 [shape = 'f32[8,256]{1,0:T(8,128)}', space=vmem, size = 0x2000, scoped, tag = 'scratch operand']
  #allocation3 [shape = 'bf16[8,256]{1,0:T(8,128)(2,1)}', space=vmem, size = 0x1000, scoped, tag = 'scratch operand']
  %s0 = inlined_call_operand.hbm [shape: bf16[8,256], index: 0, kind: input, shape index: {}]
  %s1 = inlined_call_operand.hbm [shape: bf16[256,256], index: 1, kind: input, shape index: {}]
  %s2 = inlined_call_operand.hbm [shape: f32[1,256], index: 2, kind: input, shape index: {}]
  %s3 = inlined_call_operand.hbm [shape: f32[8,256], index: 3, kind: input, shape index: {}]
  %s4 = inlined_call_operand.hbm [shape: bf16[256,128], index: 4, kind: input, shape index: {}]
  %s5 = inlined_call_operand.hbm [shape: f32[1,128], index: 5, kind: input, shape index: {}]
  %s6 = inlined_call_operand.hbm [shape: f32[8,128], index: 6, kind: input, shape index: {}]
  %s7 = inlined_call_operand.hbm [shape: bf16[128,128], index: 7, kind: input, shape index: {}]
  %s8 = inlined_call_operand.hbm [shape: f32[1,128], index: 8, kind: input, shape index: {}]
  %s9 = inlined_call_operand.hbm [shape: f32[8,128], index: 9, kind: input, shape index: {}]
  %s10 = inlined_call_operand.hbm [shape: bf16[128,128], index: 10, kind: input, shape index: {}]
  %s11 = inlined_call_operand.hbm [shape: f32[1,128], index: 11, kind: input, shape index: {}]
  %s12 = inlined_call_operand.hbm [shape: bf16[128,128], index: 12, kind: input, shape index: {}]
  %s13 = inlined_call_operand.hbm [shape: f32[1,128], index: 13, kind: input, shape index: {}]
  %s14 = inlined_call_operand.hbm [shape: f32[8,128], index: 14, kind: input, shape index: {}]
  %s15 = inlined_call_operand.hbm [shape: bf16[128,128], index: 15, kind: input, shape index: {}]
  %s16 = inlined_call_operand.hbm [shape: f32[1,128], index: 16, kind: input, shape index: {}]
  %s17 = inlined_call_operand.vmem [shape: bf16[128,128], index: 17, kind: input, shape index: {}]
  %s18 = inlined_call_operand.hbm [shape: f32[1,128], index: 18, kind: input, shape index: {}]
  %s19 = inlined_call_operand.hbm [shape: bf16[128,256], index: 19, kind: input, shape index: {}]
  %s20 = inlined_call_operand.vmem [shape: f32[1,256], index: 20, kind: input, shape index: {}]
  %s21 = inlined_call_operand.hbm [shape: bf16[256,256], index: 21, kind: input, shape index: {}]
  %s22 = inlined_call_operand.vmem [shape: f32[1,256], index: 22, kind: input, shape index: {}]
  %s23 = inlined_call_operand.hbm [shape: f32[8,128], index: 23, kind: output, shape index: {0}]
  %s24 = inlined_call_operand.hbm [shape: f32[8,128], index: 24, kind: output, shape index: {1}]
  %s25 = inlined_call_operand.hbm [shape: f32[8,256], index: 25, kind: output, shape index: {2}]
  %26 = xla_tuple %s23, %s24, %s25
  %s27 = sld [smem:[#allocation0]]
  $region237: #{tpu_custom_call.1} parent=0
    _
  %s29 = ssub.s32 1, %s27
  %s30 = scalar_select 0, %s29, %s27
  $region1: #{tpu_custom_call.1} parent=0
    #allocation4 [shape = 'u8[4096]{0}', space=vmem, size = 0x1000, scoped, tag = 'input window, operand 0']
    #allocation5 [shape = 's32[2]{0}', space=sflag, size = 0x8, scoped, tag = 'scoped memory for tpu_custom_call.1']
    #allocation6 [shape = 's32[2]{0}', space=sflag, size = 0x8, scoped, tag = 'scoped memory for tpu_custom_call.1']
    #allocation7 [shape = 'u8[131072]{0}', space=vmem, size = 0x20000, scoped, tag = 'input window, operand 1']
    #allocation8 [shape = 's32[2]{0}', space=sflag, size = 0x8, scoped, tag = 'scoped memory for tpu_custom_call.1']
    #allocation9 [shape = 'u8[1024]{0}', space=vmem, size = 0x400, scoped, tag = 'input window, operand 2, single buffered']
    #allocation10 [shape = 'u8[8192]{0}', space=vmem, size = 0x2000, scoped, tag = 'input window, operand 3, single buffered']
    #allocation11 [shape = 's32[1]{0}', space=sflag, size = 0x4, scoped, tag = 'scoped memory for tpu_custom_call.1']
    #allocation12 [shape = 'u8[65536]{0}', space=vmem, size = 0x10000, scoped, tag = 'input window, operand 4, single buffered']
    #allocation13 [shape = 'u8[512]{0}', space=vmem, size = 0x400, scoped, tag = 'input window, operand 5, single buffered']
    #allocation14 [shape = 's32[1]{0}', space=sflag, size = 0x4, scoped, tag = 'scoped memory for tpu_custom_call.1']
    #allocation15 [shape = 'u8[4096]{0}', space=vmem, size = 0x1000, scoped, tag = 'input window, operand 6, single buffered']
    #allocation16 [shape = 'u8[32768]{0}', space=vmem, size = 0x8000, scoped, tag = 'input window, operand 7, single buffered']
    #allocation17 [shape = 's32[1]{0}', space=sflag, size = 0x4, scoped, tag = 'scoped memory for tpu_custom_call.1']
    #allocation18 [shape = 'u8[512]{0}', space=vmem, size = 0x400, scoped, tag = 'input window, operand 8, single buffered']
    #allocation19 [shape = 'u8[4096]{0}', space=vmem, size = 0x1000, scoped, tag = 'input window, operand 9, single buffered']
    #allocation20 [shape = 's32[1]{0}', space=sflag, size = 0x4, scoped, tag = 'scoped memory for tpu_custom_call.1']
    #allocation21 [shape = 'u8[32768]{0}', space=vmem, size = 0x8000, scoped, tag = 'input window, operand 10, single buffered']
    #allocation22 [shape = 'u8[512]{0}', space=vmem, size = 0x400, scoped, tag = 'input window, operand 11, single buffered']
    #allocation23 [shape = 's32[1]{0}', space=sflag, size = 0x4, scoped, tag = 'scoped memory for tpu_custom_call.1']
    #allocation24 [shape = 'u8[32768]{0}', space=vmem, size = 0x8000, scoped, tag = 'input window, operand 12, single buffered']
    #allocation25 [shape = 'u8[512]{0}', space=vmem, size = 0x400, scoped, tag = 'input window, operand 13, single buffered']
    #allocation26 [shape = 's32[1]{0}', space=sflag, size = 0x4, scoped, tag = 'scoped memory for tpu_custom_call.1']
    #allocation27 [shape = 'u8[4096]{0}', space=vmem, size = 0x1000, scoped, tag = 'input window, operand 14, single buffered']
    #allocation28 [shape = 'u8[32768]{0}', space=vmem, size = 0x8000, scoped, tag = 'input window, operand 15, single buffered']
    #allocation29 [shape = 's32[1]{0}', space=sflag, size = 0x4, scoped, tag = 'scoped memory for tpu_custom_call.1']
    #allocation30 [shape = 'u8[512]{0}', space=vmem, size = 0x400, scoped, tag = 'input window, operand 16, single buffered']
    #allocation31 [shape = 'u8[512]{0}', space=vmem, size = 0x400, scoped, tag = 'input window, operand 18, single buffered']
    #allocation32 [shape = 's32[1]{0}', space=sflag, size = 0x4, scoped, tag = 'scoped memory for tpu_custom_call.1']
    #allocation33 [shape = 'u8[65536]{0}', space=vmem, size = 0x10000, scoped, tag = 'input window, operand 19, single buffered']
    #allocation34 [shape = 'u8[131072]{0}', space=vmem, size = 0x20000, scoped, tag = 'input window, operand 21']
    #allocation35 [shape = 's32[2]{0}', space=sflag, size = 0x8, scoped, tag = 'scoped memory for tpu_custom_call.1']
    #allocation36 [shape = 'u8[4096]{0}', space=vmem, size = 0x1000, scoped, tag = 'output window, operand 0, single buffered']
    #allocation37 [shape = 'u8[4096]{0}', space=vmem, size = 0x1000, scoped, tag = 'output window, operand 1, single buffered']
    #allocation38 [shape = 's32[1]{0}', space=sflag, size = 0x4, scoped, tag = 'scoped memory for tpu_custom_call.1']
    #allocation39 [shape = 'u8[8192]{0}', space=vmem, size = 0x2000, scoped, tag = 'output window, operand 2']
    %31 = vsyncpa [#allocation5], 0
    %s32 = scalar_lea.sflag [#allocation5], 1
    %33 = vsyncpa %s32, 0
    %34 = vsyncpa [#allocation8], 0
    %s35 = scalar_lea.sflag [#allocation8], 1
    %36 = vsyncpa %s35, 0
    %37 = vsyncpa [#allocation11], 0
    %38 = vsyncpa [#allocation14], 0
    %39 = vsyncpa [#allocation17], 0
    %40 = vsyncpa [#allocation20], 0
    %41 = vsyncpa [#allocation23], 0
    %42 = vsyncpa [#allocation26], 0
    %43 = vsyncpa [#allocation29], 0
    %44 = vsyncpa [#allocation32], 0
    %45 = vsyncpa [#allocation35], 0
    %s46 = scalar_lea.sflag [#allocation35], 1
    %47 = vsyncpa %s46, 0
    %48 = vsyncpa [#allocation6], 0
    %49 = vsyncpa [#allocation38], 0
    loop: start=0, step=1, limit=6
    $region2: #{tpu_custom_call.1} parent=1 // loop_pre_header
      _
    $region3: #{tpu_custom_call.1} parent=1 // loop_header
      %s51 = sphi 0, %s55
      %p52 = scmp.ge.s32.totalorder %s51, 6
      %s65 = sphi 0, %s67
      %s68 = sphi 0, %s65
      %s69 = sphi 0, %s68
      %s85 = sphi 0, %s69
      %s95 = sphi 0, %s97
      %s98 = sphi 0, %s95
      %s99 = sphi 0, %s98
      %s115 = sphi 0, %s99
      %s119 = sphi 0, %s119
      %s121 = sphi 0, %s119
      %s122 = sphi 0, %s121
      %s136 = sphi 0, %s122
      %s140 = sphi 0, %s140
      %s142 = sphi 0, %s140
      %s143 = sphi 0, %s142
      %s157 = sphi 0, %s143
      %s161 = sphi 0, %s161
      %s163 = sphi 0, %s161
      %s164 = sphi 0, %s163
      %s178 = sphi 0, %s164
      %s182 = sphi 0, %s182
      %s184 = sphi 0, %s182
      %s185 = sphi 0, %s184
      %s199 = sphi 0, %s185
      %s203 = sphi 0, %s203
      %s205 = sphi 0, %s203
      %s206 = sphi 0, %s205
      %s220 = sphi 0, %s206
      %s224 = sphi 0, %s224
      %s226 = sphi 0, %s224
      %s227 = sphi 0, %s226
      %s241 = sphi 0, %s227
      %s245 = sphi 0, %s245
      %s247 = sphi 0, %s245
      %s248 = sphi 0, %s247
      %s262 = sphi 0, %s248
      %s266 = sphi 0, %s266
      %s268 = sphi 0, %s266
      %s269 = sphi 0, %s268
      %s283 = sphi 0, %s269
      %s287 = sphi 0, %s287
      %s289 = sphi 0, %s287
      %s290 = sphi 0, %s289
      %s304 = sphi 0, %s290
      %s308 = sphi 0, %s308
      %s310 = sphi 0, %s308
      %s311 = sphi 0, %s310
      %s325 = sphi 0, %s311
      %s329 = sphi 0, %s329
      %s331 = sphi 0, %s329
      %s332 = sphi 0, %s331
      %s346 = sphi 0, %s332
      %s350 = sphi 0, %s350
      %s352 = sphi 0, %s350
      %s353 = sphi 0, %s352
      %s367 = sphi 0, %s353
      %s371 = sphi 0, %s371
      %s373 = sphi 0, %s371
      %s374 = sphi 0, %s373
      %s388 = sphi 0, %s374
      %s392 = sphi 0, %s392
      %s394 = sphi 0, %s392
      %s395 = sphi 0, %s394
      %s409 = sphi 0, %s395
      %s413 = sphi 0, %s413
      %s415 = sphi 0, %s413
      %s416 = sphi 0, %s415
      %s430 = sphi 0, %s416
      %s434 = sphi 0, %s434
      %s436 = sphi 0, %s434
      %s437 = sphi 0, %s436
      %s451 = sphi 0, %s437
      %s455 = sphi 0, %s455
      %s457 = sphi 0, %s455
      %s458 = sphi 0, %s457
      %s472 = sphi 0, %s458
      %s476 = sphi 0, %s476
      %s478 = sphi 0, %s476
      %s479 = sphi 0, %s478
      %s493 = sphi 0, %s479
      %s497 = sphi 0, %s497
      %s499 = sphi 0, %s497
      %s500 = sphi 0, %s499
      %s514 = sphi 0, %s500
      %s526 = sphi 0, %s528
      %s529 = sphi 0, %s526
      %s530 = sphi 0, %s529
      %s546 = sphi 0, %s530
      %s558 = sphi 0, %s560
      %s561 = sphi 0, %s558
      %s562 = sphi 0, %s561
      %s578 = sphi 0, %s562
      %s582 = sphi 0, %s582
      %s584 = sphi 0, %s582
      %s585 = sphi 0, %s584
      %s599 = sphi 0, %s585
      %s603 = sphi 0, %s603
      %s605 = sphi 0, %s603
      %s606 = sphi 0, %s605
      %s620 = sphi 0, %s606
      %s632 = sphi 0, %s634
      %s635 = sphi 0, %s632
      %s636 = sphi 0, %s635
      %s652 = sphi 0, %s636
    $region4: #{tpu_custom_call.1} parent=1 // loop_header_branch
      %54 = sbr.rel (%p52) target = $region8
    $region5: #{tpu_custom_call.1} parent=1 // loop_body
      %s56 = ssub.s32 %s51, 1
      %s57 = ssub.s32 %s51, 2
      %s58 = sadd.s32 %s51, 1
      %p59 = scmp.lt.s32.totalorder %s51, 1
      %s60 = scalar_select %p59, %s51, 1
      %p61 = scmp.lt.s32.totalorder %s58, 1
      %s62 = scalar_select %p61, %s58, 1
      %s63 = ssub.s32 %s60, %s62
      %p64 = scmp.eq.s32.totalorder %s63, 0
      %s66 = sadd.s32 %s65, 1
      %s67 = scalar_select %p64, %s65, %s66
      %p70 = pneg %p64
      %p71 = scmp.eq.s32.totalorder %s51, 3
      %p72 = por %p70, %p71
      %p73 = scmp.ne.s32.totalorder %s65, %s68
      %p74 = scmp.eq.s32.totalorder %s51, 0
      %p75 = por %p73, %p74
      %p76 = scmp.ne.s32.totalorder %s65, %s68
      %p77 = scmp.eq.s32.totalorder %s56, 3
      %p78 = por %p76, %p77
      %p79 = scmp.ne.s32.totalorder %s68, %s69
      %p80 = scmp.eq.s32.totalorder %s56, 0
      %p81 = por %p79, %p80
      %p82 = scmp.ne.s32.totalorder %s68, %s69
      %p83 = scmp.eq.s32.totalorder %s57, 3
      %p84 = por %p82, %p83
      %p86 = scmp.ne.s32.totalorder %s69, %s85
      %p87 = scmp.eq.s32.totalorder %s57, 0
      %p88 = por %p86, %p87
      %p89 = scmp.lt.s32.totalorder %s51, 1
      %s90 = scalar_select %p89, %s51, 1
      %p91 = scmp.lt.s32.totalorder %s58, 1
      %s92 = scalar_select %p91, %s58, 1
      %s93 = ssub.s32 %s90, %s92
      %p94 = scmp.eq.s32.totalorder %s93, 0
      %s96 = sadd.s32 %s95, 1
      %s97 = scalar_select %p94, %s95, %s96
      %p100 = pneg %p94
      %p101 = scmp.eq.s32.totalorder %s51, 3
      %p102 = por %p100, %p101
      %p103 = scmp.ne.s32.totalorder %s95, %s98
      %p104 = scmp.eq.s32.totalorder %s51, 0
      %p105 = por %p103, %p104
      %p106 = scmp.ne.s32.totalorder %s95, %s98
      %p107 = scmp.eq.s32.totalorder %s56, 3
      %p108 = por %p106, %p107
      %p109 = scmp.ne.s32.totalorder %s98, %s99
      %p110 = scmp.eq.s32.totalorder %s56, 0
      %p111 = por %p109, %p110
      %p112 = scmp.ne.s32.totalorder %s98, %s99
      %p113 = scmp.eq.s32.totalorder %s57, 3
      %p114 = por %p112, %p113
      %p116 = scmp.ne.s32.totalorder %s99, %s115
      %p117 = scmp.eq.s32.totalorder %s57, 0
      %p118 = por %p116, %p117
      %s120 = sadd.s32 %s119, 1
      %p123 = scmp.eq.s32.totalorder %s51, 3
      %p124 = scmp.ne.s32.totalorder %s119, %s121
      %p125 = scmp.eq.s32.totalorder %s51, 0
      %p126 = por %p124, %p125
      %p127 = scmp.ne.s32.totalorder %s119, %s121
      %p128 = scmp.eq.s32.totalorder %s56, 3
      %p129 = por %p127, %p128
      %p130 = scmp.ne.s32.totalorder %s121, %s122
      %p131 = scmp.eq.s32.totalorder %s56, 0
      %p132 = por %p130, %p131
      %p133 = scmp.ne.s32.totalorder %s121, %s122
      %p134 = scmp.eq.s32.totalorder %s57, 3
      %p135 = por %p133, %p134
      %p137 = scmp.ne.s32.totalorder %s122, %s136
      %p138 = scmp.eq.s32.totalorder %s57, 0
      %p139 = por %p137, %p138
      %s141 = sadd.s32 %s140, 1
      %p144 = scmp.eq.s32.totalorder %s51, 3
      %p145 = scmp.ne.s32.totalorder %s140, %s142
      %p146 = scmp.eq.s32.totalorder %s51, 0
      %p147 = por %p145, %p146
      %p148 = scmp.ne.s32.totalorder %s140, %s142
      %p149 = scmp.eq.s32.totalorder %s56, 3
      %p150 = por %p148, %p149
      %p151 = scmp.ne.s32.totalorder %s142, %s143
      %p152 = scmp.eq.s32.totalorder %s56, 0
      %p153 = por %p151, %p152
      %p154 = scmp.ne.s32.totalorder %s142, %s143
      %p155 = scmp.eq.s32.totalorder %s57, 3
      %p156 = por %p154, %p155
      %p158 = scmp.ne.s32.totalorder %s143, %s157
      %p159 = scmp.eq.s32.totalorder %s57, 0
      %p160 = por %p158, %p159
      %s162 = sadd.s32 %s161, 1
      %p165 = scmp.eq.s32.totalorder %s51, 3
      %p166 = scmp.ne.s32.totalorder %s161, %s163
      %p167 = scmp.eq.s32.totalorder %s51, 0
      %p168 = por %p166, %p167
      %p169 = scmp.ne.s32.totalorder %s161, %s163
      %p170 = scmp.eq.s32.totalorder %s56, 3
      %p171 = por %p169, %p170
      %p172 = scmp.ne.s32.totalorder %s163, %s164
      %p173 = scmp.eq.s32.totalorder %s56, 0
      %p174 = por %p172, %p173
      %p175 = scmp.ne.s32.totalorder %s163, %s164
      %p176 = scmp.eq.s32.totalorder %s57, 3
      %p177 = por %p175, %p176
      %p179 = scmp.ne.s32.totalorder %s164, %s178
      %p180 = scmp.eq.s32.totalorder %s57, 0
      %p181 = por %p179, %p180
      %s183 = sadd.s32 %s182, 1
      %p186 = scmp.eq.s32.totalorder %s51, 3
      %p187 = scmp.ne.s32.totalorder %s182, %s184
      %p188 = scmp.eq.s32.totalorder %s51, 0
      %p189 = por %p187, %p188
      %p190 = scmp.ne.s32.totalorder %s182, %s184
      %p191 = scmp.eq.s32.totalorder %s56, 3
      %p192 = por %p190, %p191
      %p193 = scmp.ne.s32.totalorder %s184, %s185
      %p194 = scmp.eq.s32.totalorder %s56, 0
      %p195 = por %p193, %p194
      %p196 = scmp.ne.s32.totalorder %s184, %s185
      %p197 = scmp.eq.s32.totalorder %s57, 3
      %p198 = por %p196, %p197
      %p200 = scmp.ne.s32.totalorder %s185, %s199
      %p201 = scmp.eq.s32.totalorder %s57, 0
      %p202 = por %p200, %p201
      %s204 = sadd.s32 %s203, 1
      %p207 = scmp.eq.s32.totalorder %s51, 3
      %p208 = scmp.ne.s32.totalorder %s203, %s205
      %p209 = scmp.eq.s32.totalorder %s51, 0
      %p210 = por %p208, %p209
      %p211 = scmp.ne.s32.totalorder %s203, %s205
      %p212 = scmp.eq.s32.totalorder %s56, 3
      %p213 = por %p211, %p212
      %p214 = scmp.ne.s32.totalorder %s205, %s206
      %p215 = scmp.eq.s32.totalorder %s56, 0
      %p216 = por %p214, %p215
      %p217 = scmp.ne.s32.totalorder %s205, %s206
      %p218 = scmp.eq.s32.totalorder %s57, 3
      %p219 = por %p217, %p218
      %p221 = scmp.ne.s32.totalorder %s206, %s220
      %p222 = scmp.eq.s32.totalorder %s57, 0
      %p223 = por %p221, %p222
      %s225 = sadd.s32 %s224, 1
      %p228 = scmp.eq.s32.totalorder %s51, 3
      %p229 = scmp.ne.s32.totalorder %s224, %s226
      %p230 = scmp.eq.s32.totalorder %s51, 0
      %p231 = por %p229, %p230
      %p232 = scmp.ne.s32.totalorder %s224, %s226
      %p233 = scmp.eq.s32.totalorder %s56, 3
      %p234 = por %p232, %p233
      %p235 = scmp.ne.s32.totalorder %s226, %s227
      %p236 = scmp.eq.s32.totalorder %s56, 0
      %p237 = por %p235, %p236
      %p238 = scmp.ne.s32.totalorder %s226, %s227
      %p239 = scmp.eq.s32.totalorder %s57, 3
      %p240 = por %p238, %p239
      %p242 = scmp.ne.s32.totalorder %s227, %s241
      %p243 = scmp.eq.s32.totalorder %s57, 0
      %p244 = por %p242, %p243
      %s246 = sadd.s32 %s245, 1
      %p249 = scmp.eq.s32.totalorder %s51, 3
      %p250 = scmp.ne.s32.totalorder %s245, %s247
      %p251 = scmp.eq.s32.totalorder %s51, 0
      %p252 = por %p250, %p251
      %p253 = scmp.ne.s32.totalorder %s245, %s247
      %p254 = scmp.eq.s32.totalorder %s56, 3
      %p255 = por %p253, %p254
      %p256 = scmp.ne.s32.totalorder %s247, %s248
      %p257 = scmp.eq.s32.totalorder %s56, 0
      %p258 = por %p256, %p257
      %p259 = scmp.ne.s32.totalorder %s247, %s248
      %p260 = scmp.eq.s32.totalorder %s57, 3
      %p261 = por %p259, %p260
      %p263 = scmp.ne.s32.totalorder %s248, %s262
      %p264 = scmp.eq.s32.totalorder %s57, 0
      %p265 = por %p263, %p264
      %s267 = sadd.s32 %s266, 1
      %p270 = scmp.eq.s32.totalorder %s51, 3
      %p271 = scmp.ne.s32.totalorder %s266, %s268
      %p272 = scmp.eq.s32.totalorder %s51, 0
      %p273 = por %p271, %p272
      %p274 = scmp.ne.s32.totalorder %s266, %s268
      %p275 = scmp.eq.s32.totalorder %s56, 3
      %p276 = por %p274, %p275
      %p277 = scmp.ne.s32.totalorder %s268, %s269
      %p278 = scmp.eq.s32.totalorder %s56, 0
      %p279 = por %p277, %p278
      %p280 = scmp.ne.s32.totalorder %s268, %s269
      %p281 = scmp.eq.s32.totalorder %s57, 3
      %p282 = por %p280, %p281
      %p284 = scmp.ne.s32.totalorder %s269, %s283
      %p285 = scmp.eq.s32.totalorder %s57, 0
      %p286 = por %p284, %p285
      %s288 = sadd.s32 %s287, 1
      %p291 = scmp.eq.s32.totalorder %s51, 3
      %p292 = scmp.ne.s32.totalorder %s287, %s289
      %p293 = scmp.eq.s32.totalorder %s51, 0
      %p294 = por %p292, %p293
      %p295 = scmp.ne.s32.totalorder %s287, %s289
      %p296 = scmp.eq.s32.totalorder %s56, 3
      %p297 = por %p295, %p296
      %p298 = scmp.ne.s32.totalorder %s289, %s290
      %p299 = scmp.eq.s32.totalorder %s56, 0
      %p300 = por %p298, %p299
      %p301 = scmp.ne.s32.totalorder %s289, %s290
      %p302 = scmp.eq.s32.totalorder %s57, 3
      %p303 = por %p301, %p302
      %p305 = scmp.ne.s32.totalorder %s290, %s304
      %p306 = scmp.eq.s32.totalorder %s57, 0
      %p307 = por %p305, %p306
      %s309 = sadd.s32 %s308, 1
      %p312 = scmp.eq.s32.totalorder %s51, 3
      %p313 = scmp.ne.s32.totalorder %s308, %s310
      %p314 = scmp.eq.s32.totalorder %s51, 0
      %p315 = por %p313, %p314
      %p316 = scmp.ne.s32.totalorder %s308, %s310
      %p317 = scmp.eq.s32.totalorder %s56, 3
      %p318 = por %p316, %p317
      %p319 = scmp.ne.s32.totalorder %s310, %s311
      %p320 = scmp.eq.s32.totalorder %s56, 0
      %p321 = por %p319, %p320
      %p322 = scmp.ne.s32.totalorder %s310, %s311
      %p323 = scmp.eq.s32.totalorder %s57, 3
      %p324 = por %p322, %p323
      %p326 = scmp.ne.s32.totalorder %s311, %s325
      %p327 = scmp.eq.s32.totalorder %s57, 0
      %p328 = por %p326, %p327
      %s330 = sadd.s32 %s329, 1
      %p333 = scmp.eq.s32.totalorder %s51, 3
      %p334 = scmp.ne.s32.totalorder %s329, %s331
      %p335 = scmp.eq.s32.totalorder %s51, 0
      %p336 = por %p334, %p335
      %p337 = scmp.ne.s32.totalorder %s329, %s331
      %p338 = scmp.eq.s32.totalorder %s56, 3
      %p339 = por %p337, %p338
      %p340 = scmp.ne.s32.totalorder %s331, %s332
      %p341 = scmp.eq.s32.totalorder %s56, 0
      %p342 = por %p340, %p341
      %p343 = scmp.ne.s32.totalorder %s331, %s332
      %p344 = scmp.eq.s32.totalorder %s57, 3
      %p345 = por %p343, %p344
      %p347 = scmp.ne.s32.totalorder %s332, %s346
      %p348 = scmp.eq.s32.totalorder %s57, 0
      %p349 = por %p347, %p348
      %s351 = sadd.s32 %s350, 1
      %p354 = scmp.eq.s32.totalorder %s51, 3
      %p355 = scmp.ne.s32.totalorder %s350, %s352
      %p356 = scmp.eq.s32.totalorder %s51, 0
      %p357 = por %p355, %p356
      %p358 = scmp.ne.s32.totalorder %s350, %s352
      %p359 = scmp.eq.s32.totalorder %s56, 3
      %p360 = por %p358, %p359
      %p361 = scmp.ne.s32.totalorder %s352, %s353
      %p362 = scmp.eq.s32.totalorder %s56, 0
      %p363 = por %p361, %p362
      %p364 = scmp.ne.s32.totalorder %s352, %s353
      %p365 = scmp.eq.s32.totalorder %s57, 3
      %p366 = por %p364, %p365
      %p368 = scmp.ne.s32.totalorder %s353, %s367
      %p369 = scmp.eq.s32.totalorder %s57, 0
      %p370 = por %p368, %p369
      %s372 = sadd.s32 %s371, 1
      %p375 = scmp.eq.s32.totalorder %s51, 3
      %p376 = scmp.ne.s32.totalorder %s371, %s373
      %p377 = scmp.eq.s32.totalorder %s51, 0
      %p378 = por %p376, %p377
      %p379 = scmp.ne.s32.totalorder %s371, %s373
      %p380 = scmp.eq.s32.totalorder %s56, 3
      %p381 = por %p379, %p380
      %p382 = scmp.ne.s32.totalorder %s373, %s374
      %p383 = scmp.eq.s32.totalorder %s56, 0
      %p384 = por %p382, %p383
      %p385 = scmp.ne.s32.totalorder %s373, %s374
      %p386 = scmp.eq.s32.totalorder %s57, 3
      %p387 = por %p385, %p386
      %p389 = scmp.ne.s32.totalorder %s374, %s388
      %p390 = scmp.eq.s32.totalorder %s57, 0
      %p391 = por %p389, %p390
      %s393 = sadd.s32 %s392, 1
      %p396 = scmp.eq.s32.totalorder %s51, 3
      %p397 = scmp.ne.s32.totalorder %s392, %s394
      %p398 = scmp.eq.s32.totalorder %s51, 0
      %p399 = por %p397, %p398
      %p400 = scmp.ne.s32.totalorder %s392, %s394
      %p401 = scmp.eq.s32.totalorder %s56, 3
      %p402 = por %p400, %p401
      %p403 = scmp.ne.s32.totalorder %s394, %s395
      %p404 = scmp.eq.s32.totalorder %s56, 0
      %p405 = por %p403, %p404
      %p406 = scmp.ne.s32.totalorder %s394, %s395
      %p407 = scmp.eq.s32.totalorder %s57, 3
      %p408 = por %p406, %p407
      %p410 = scmp.ne.s32.totalorder %s395, %s409
      %p411 = scmp.eq.s32.totalorder %s57, 0
      %p412 = por %p410, %p411
      %s414 = sadd.s32 %s413, 1
      %p417 = scmp.eq.s32.totalorder %s51, 3
      %p418 = scmp.ne.s32.totalorder %s413, %s415
      %p419 = scmp.eq.s32.totalorder %s51, 0
      %p420 = por %p418, %p419
      %p421 = scmp.ne.s32.totalorder %s413, %s415
      %p422 = scmp.eq.s32.totalorder %s56, 3
      %p423 = por %p421, %p422
      %p424 = scmp.ne.s32.totalorder %s415, %s416
      %p425 = scmp.eq.s32.totalorder %s56, 0
      %p426 = por %p424, %p425
      %p427 = scmp.ne.s32.totalorder %s415, %s416
      %p428 = scmp.eq.s32.totalorder %s57, 3
      %p429 = por %p427, %p428
      %p431 = scmp.ne.s32.totalorder %s416, %s430
      %p432 = scmp.eq.s32.totalorder %s57, 0
      %p433 = por %p431, %p432
      %s435 = sadd.s32 %s434, 1
      %p438 = scmp.eq.s32.totalorder %s51, 3
      %p439 = scmp.ne.s32.totalorder %s434, %s436
      %p440 = scmp.eq.s32.totalorder %s51, 0
      %p441 = por %p439, %p440
      %p442 = scmp.ne.s32.totalorder %s434, %s436
      %p443 = scmp.eq.s32.totalorder %s56, 3
      %p444 = por %p442, %p443
      %p445 = scmp.ne.s32.totalorder %s436, %s437
      %p446 = scmp.eq.s32.totalorder %s56, 0
      %p447 = por %p445, %p446
      %p448 = scmp.ne.s32.totalorder %s436, %s437
      %p449 = scmp.eq.s32.totalorder %s57, 3
      %p450 = por %p448, %p449
      %p452 = scmp.ne.s32.totalorder %s437, %s451
      %p453 = scmp.eq.s32.totalorder %s57, 0
      %p454 = por %p452, %p453
      %s456 = sadd.s32 %s455, 1
      %p459 = scmp.eq.s32.totalorder %s51, 3
      %p460 = scmp.ne.s32.totalorder %s455, %s457
      %p461 = scmp.eq.s32.totalorder %s51, 0
      %p462 = por %p460, %p461
      %p463 = scmp.ne.s32.totalorder %s455, %s457
      %p464 = scmp.eq.s32.totalorder %s56, 3
      %p465 = por %p463, %p464
      %p466 = scmp.ne.s32.totalorder %s457, %s458
      %p467 = scmp.eq.s32.totalorder %s56, 0
      %p468 = por %p466, %p467
      %p469 = scmp.ne.s32.totalorder %s457, %s458
      %p470 = scmp.eq.s32.totalorder %s57, 3
      %p471 = por %p469, %p470
      %p473 = scmp.ne.s32.totalorder %s458, %s472
      %p474 = scmp.eq.s32.totalorder %s57, 0
      %p475 = por %p473, %p474
      %s477 = sadd.s32 %s476, 1
      %p480 = scmp.eq.s32.totalorder %s51, 3
      %p481 = scmp.ne.s32.totalorder %s476, %s478
      %p482 = scmp.eq.s32.totalorder %s51, 0
      %p483 = por %p481, %p482
      %p484 = scmp.ne.s32.totalorder %s476, %s478
      %p485 = scmp.eq.s32.totalorder %s56, 3
      %p486 = por %p484, %p485
      %p487 = scmp.ne.s32.totalorder %s478, %s479
      %p488 = scmp.eq.s32.totalorder %s56, 0
      %p489 = por %p487, %p488
      %p490 = scmp.ne.s32.totalorder %s478, %s479
      %p491 = scmp.eq.s32.totalorder %s57, 3
      %p492 = por %p490, %p491
      %p494 = scmp.ne.s32.totalorder %s479, %s493
      %p495 = scmp.eq.s32.totalorder %s57, 0
      %p496 = por %p494, %p495
      %s498 = sadd.s32 %s497, 1
      %p501 = scmp.eq.s32.totalorder %s51, 3
      %p502 = scmp.ne.s32.totalorder %s497, %s499
      %p503 = scmp.eq.s32.totalorder %s51, 0
      %p504 = por %p502, %p503
      %p505 = scmp.ne.s32.totalorder %s497, %s499
      %p506 = scmp.eq.s32.totalorder %s56, 3
      %p507 = por %p505, %p506
      %p508 = scmp.ne.s32.totalorder %s499, %s500
      %p509 = scmp.eq.s32.totalorder %s56, 0
      %p510 = por %p508, %p509
      %p511 = scmp.ne.s32.totalorder %s499, %s500
      %p512 = scmp.eq.s32.totalorder %s57, 3
      %p513 = por %p511, %p512
      %p515 = scmp.ne.s32.totalorder %s500, %s514
      %p516 = scmp.eq.s32.totalorder %s57, 0
      %p517 = por %p515, %p516
      %s518 = ssub.s32 %s51, 2
      %p519 = scmp.gt.s32.totalorder %s518, 0
      %s520 = scalar_select %p519, %s518, 0
      %s521 = ssub.s32 %s58, 2
      %p522 = scmp.gt.s32.totalorder %s521, 0
      %s523 = scalar_select %p522, %s521, 0
      %s524 = ssub.s32 %s520, %s523
      %p525 = scmp.eq.s32.totalorder %s524, 0
      %s527 = sadd.s32 %s526, 1
      %s528 = scalar_select %p525, %s526, %s527
      %p531 = pneg %p525
      %p532 = scmp.eq.s32.totalorder %s51, 3
      %p533 = por %p531, %p532
      %p534 = scmp.ne.s32.totalorder %s526, %s529
      %p535 = scmp.eq.s32.totalorder %s51, 0
      %p536 = por %p534, %p535
      %p537 = scmp.ne.s32.totalorder %s526, %s529
      %p538 = scmp.eq.s32.totalorder %s56, 3
      %p539 = por %p537, %p538
      %p540 = scmp.ne.s32.totalorder %s529, %s530
      %p541 = scmp.eq.s32.totalorder %s56, 0
      %p542 = por %p540, %p541
      %p543 = scmp.ne.s32.totalorder %s529, %s530
      %p544 = scmp.eq.s32.totalorder %s57, 3
      %p545 = por %p543, %p544
      %p547 = scmp.ne.s32.totalorder %s530, %s546
      %p548 = scmp.eq.s32.totalorder %s57, 0
      %p549 = por %p547, %p548
      %s550 = ssub.s32 %s51, 2
      %p551 = scmp.gt.s32.totalorder %s550, 0
      %s552 = scalar_select %p551, %s550, 0
      %s553 = ssub.s32 %s58, 2
      %p554 = scmp.gt.s32.totalorder %s553, 0
      %s555 = scalar_select %p554, %s553, 0
      %s556 = ssub.s32 %s552, %s555
      %p557 = scmp.eq.s32.totalorder %s556, 0
      %s559 = sadd.s32 %s558, 1
      %s560 = scalar_select %p557, %s558, %s559
      %p563 = pneg %p557
      %p564 = scmp.eq.s32.totalorder %s51, 3
      %p565 = por %p563, %p564
      %p566 = scmp.ne.s32.totalorder %s558, %s561
      %p567 = scmp.eq.s32.totalorder %s51, 0
      %p568 = por %p566, %p567
      %p569 = scmp.ne.s32.totalorder %s558, %s561
      %p570 = scmp.eq.s32.totalorder %s56, 3
      %p571 = por %p569, %p570
      %p572 = scmp.ne.s32.totalorder %s561, %s562
      %p573 = scmp.eq.s32.totalorder %s56, 0
      %p574 = por %p572, %p573
      %p575 = scmp.ne.s32.totalorder %s561, %s562
      %p576 = scmp.eq.s32.totalorder %s57, 3
      %p577 = por %p575, %p576
      %p579 = scmp.ne.s32.totalorder %s562, %s578
      %p580 = scmp.eq.s32.totalorder %s57, 0
      %p581 = por %p579, %p580
      %s583 = sadd.s32 %s582, 1
      %p586 = scmp.eq.s32.totalorder %s51, 3
      %p587 = scmp.ne.s32.totalorder %s582, %s584
      %p588 = scmp.eq.s32.totalorder %s51, 0
      %p589 = por %p587, %p588
      %p590 = scmp.ne.s32.totalorder %s582, %s584
      %p591 = scmp.eq.s32.totalorder %s56, 3
      %p592 = por %p590, %p591
      %p593 = scmp.ne.s32.totalorder %s584, %s585
      %p594 = scmp.eq.s32.totalorder %s56, 0
      %p595 = por %p593, %p594
      %p596 = scmp.ne.s32.totalorder %s584, %s585
      %p597 = scmp.eq.s32.totalorder %s57, 3
      %p598 = por %p596, %p597
      %p600 = scmp.ne.s32.totalorder %s585, %s599
      %p601 = scmp.eq.s32.totalorder %s57, 0
      %p602 = por %p600, %p601
      %s604 = sadd.s32 %s603, 1
      %p607 = scmp.eq.s32.totalorder %s51, 3
      %p608 = scmp.ne.s32.totalorder %s603, %s605
      %p609 = scmp.eq.s32.totalorder %s51, 0
      %p610 = por %p608, %p609
      %p611 = scmp.ne.s32.totalorder %s603, %s605
      %p612 = scmp.eq.s32.totalorder %s56, 3
      %p613 = por %p611, %p612
      %p614 = scmp.ne.s32.totalorder %s605, %s606
      %p615 = scmp.eq.s32.totalorder %s56, 0
      %p616 = por %p614, %p615
      %p617 = scmp.ne.s32.totalorder %s605, %s606
      %p618 = scmp.eq.s32.totalorder %s57, 3
      %p619 = por %p617, %p618
      %p621 = scmp.ne.s32.totalorder %s606, %s620
      %p622 = scmp.eq.s32.totalorder %s57, 0
      %p623 = por %p621, %p622
      %s624 = ssub.s32 %s51, 2
      %p625 = scmp.gt.s32.totalorder %s624, 0
      %s626 = scalar_select %p625, %s624, 0
      %s627 = ssub.s32 %s58, 2
      %p628 = scmp.gt.s32.totalorder %s627, 0
      %s629 = scalar_select %p628, %s627, 0
      %s630 = ssub.s32 %s626, %s629
      %p631 = scmp.eq.s32.totalorder %s630, 0
      %s633 = sadd.s32 %s632, 1
      %s634 = scalar_select %p631, %s632, %s633
      %p637 = pneg %p631
      %p638 = scmp.eq.s32.totalorder %s51, 3
      %p639 = por %p637, %p638
      %p640 = scmp.ne.s32.totalorder %s632, %s635
      %p641 = scmp.eq.s32.totalorder %s51, 0
      %p642 = por %p640, %p641
      %p643 = scmp.ne.s32.totalorder %s632, %s635
      %p644 = scmp.eq.s32.totalorder %s56, 3
      %p645 = por %p643, %p644
      %p646 = scmp.ne.s32.totalorder %s635, %s636
      %p647 = scmp.eq.s32.totalorder %s56, 0
      %p648 = por %p646, %p647
      %p649 = scmp.ne.s32.totalorder %s635, %s636
      %p650 = scmp.eq.s32.totalorder %s57, 3
      %p651 = por %p649, %p650
      %p653 = scmp.ne.s32.totalorder %s636, %s652
      %p654 = scmp.eq.s32.totalorder %s57, 0
      %p655 = por %p653, %p654
      %p656 = scmp.le.s32.totalorder 1, %s51
      %p657 = scmp.lt.s32.totalorder %s51, 5
      %p658 = pnand %p656, %p657
      %p659 = pneg %p658
      // Predicated region
      $region9: #{tpu_custom_call.1} parent=5 // pred_check
        _
      $region10: #{tpu_custom_call.1} parent=5 // pred_check_branch
        %661 = sbr.rel (%p658) target = $region12
      $region11: #{tpu_custom_call.1} parent=5 // pred_region
        %s662 = ssub.s32 %s51, 1
        // Predicated region
        $region13: #{tpu_custom_call.1} parent=11 // pred_check
          %p663 = pneg %p132
        $region14: #{tpu_custom_call.1} parent=11 // pred_check_branch
          %665 = sbr.rel (%p663) target = $region16
        $region15: #{tpu_custom_call.1} parent=11 // pred_region
          %s667 = ssub.s32 32, 32
          %668 = vsyncadd [#allocation8], %s667
          %s670 = sshll.u32 [#allocation9], 4
          %s671 = int_to_ptr.vmem [resolvable:$true] %s670
          %673 = dma.hbm_to_vmem [thread:$0]  %s2, 32, %s671, [#allocation8]
        $region16: #{tpu_custom_call.1} parent=11 // pred_fallthru
          _
        // Predicated region
        $region17: #{tpu_custom_call.1} parent=11 // pred_check
          %p674 = pneg %p153
        $region18: #{tpu_custom_call.1} parent=11 // pred_check_branch
          %676 = sbr.rel (%p674) target = $region20
        $region19: #{tpu_custom_call.1} parent=11 // pred_region
          %s678 = ssub.s32 256, 256
          %679 = vsyncadd [#allocation11], %s678
          %s681 = sshll.u32 [#allocation10], 4
          %s682 = int_to_ptr.vmem [resolvable:$true] %s681
          %684 = dma.hbm_to_vmem [thread:$0]  %s3, 256, %s682, [#allocation11]
        $region20: #{tpu_custom_call.1} parent=11 // pred_fallthru
          _
        // Predicated region
        $region21: #{tpu_custom_call.1} parent=11 // pred_check
          %p685 = pneg %p174
        $region22: #{tpu_custom_call.1} parent=11 // pred_check_branch
          %687 = sbr.rel (%p685) target = $region24
        $region23: #{tpu_custom_call.1} parent=11 // pred_region
          %s689 = ssub.s32 2048, 2048
          %690 = vsyncadd [#allocation11], %s689
          %s691 = sshll.u32 [#allocation12], 4
          %s692 = int_to_ptr.vmem [resolvable:$true] %s691
          %697 = dma.hbm_to_vmem [thread:$0]  %s4, 2048, %s692, [#allocation11], 64, 64, 4
        $region24: #{tpu_custom_call.1} parent=11 // pred_fallthru
          _
        // Predicated region
        $region25: #{tpu_custom_call.1} parent=11 // pred_check
          %p698 = pneg %p195
        $region26: #{tpu_custom_call.1} parent=11 // pred_check_branch
          %700 = sbr.rel (%p698) target = $region28
        $region27: #{tpu_custom_call.1} parent=11 // pred_region
          %s702 = ssub.s32 16, 16
          %703 = vsyncadd [#allocation14], %s702
          %s705 = sshll.u32 [#allocation13], 4
          %s706 = int_to_ptr.vmem [resolvable:$true] %s705
          %708 = dma.hbm_to_vmem [thread:$0]  %s5, 16, %s706, [#allocation14]
        $region28: #{tpu_custom_call.1} parent=11 // pred_fallthru
          _
        // Predicated region
        $region29: #{tpu_custom_call.1} parent=11 // pred_check
          %p709 = pneg %p216
        $region30: #{tpu_custom_call.1} parent=11 // pred_check_branch
          %711 = sbr.rel (%p709) target = $region32
        $region31: #{tpu_custom_call.1} parent=11 // pred_region
          %s713 = ssub.s32 128, 128
          %714 = vsyncadd [#allocation14], %s713
          %s716 = sshll.u32 [#allocation15], 4
          %s717 = int_to_ptr.vmem [resolvable:$true] %s716
          %719 = dma.hbm_to_vmem [thread:$0]  %s6, 128, %s717, [#allocation14]
        $region32: #{tpu_custom_call.1} parent=11 // pred_fallthru
          _
        // Predicated region
        $region33: #{tpu_custom_call.1} parent=11 // pred_check
          %p720 = pneg %p237
        $region34: #{tpu_custom_call.1} parent=11 // pred_check_branch
          %722 = sbr.rel (%p720) target = $region36
        $region35: #{tpu_custom_call.1} parent=11 // pred_region
          %s724 = ssub.s32 1024, 1024
          %725 = vsyncadd [#allocation17], %s724
          %s726 = sshll.u32 [#allocation16], 4
          %s727 = int_to_ptr.vmem [resolvable:$true] %s726
          %732 = dma.hbm_to_vmem [thread:$0]  %s7, 1024, %s727, [#allocation17], 64, 64, 4
        $region36: #{tpu_custom_call.1} parent=11 // pred_fallthru
          _
        // Predicated region
        $region37: #{tpu_custom_call.1} parent=11 // pred_check
          %p733 = pneg %p258
        $region38: #{tpu_custom_call.1} parent=11 // pred_check_branch
          %735 = sbr.rel (%p733) target = $region40
        $region39: #{tpu_custom_call.1} parent=11 // pred_region
          %s737 = ssub.s32 16, 16
          %738 = vsyncadd [#allocation17], %s737
          %s740 = sshll.u32 [#allocation18], 4
          %s741 = int_to_ptr.vmem [resolvable:$true] %s740
          %743 = dma.hbm_to_vmem [thread:$0]  %s8, 16, %s741, [#allocation17]
        $region40: #{tpu_custom_call.1} parent=11 // pred_fallthru
          _
        // Predicated region
        $region41: #{tpu_custom_call.1} parent=11 // pred_check
          %p744 = pneg %p279
        $region42: #{tpu_custom_call.1} parent=11 // pred_check_branch
          %746 = sbr.rel (%p744) target = $region44
        $region43: #{tpu_custom_call.1} parent=11 // pred_region
          %s748 = ssub.s32 128, 128
          %749 = vsyncadd [#allocation20], %s748
          %s751 = sshll.u32 [#allocation19], 4
          %s752 = int_to_ptr.vmem [resolvable:$true] %s751
          %754 = dma.hbm_to_vmem [thread:$0]  %s9, 128, %s752, [#allocation20]
        $region44: #{tpu_custom_call.1} parent=11 // pred_fallthru
          _
        // Predicated region
        $region45: #{tpu_custom_call.1} parent=11 // pred_check
          %p755 = pneg %p300
        $region46: #{tpu_custom_call.1} parent=11 // pred_check_branch
          %757 = sbr.rel (%p755) target = $region48
        $region47: #{tpu_custom_call.1} parent=11 // pred_region
          %s759 = ssub.s32 1024, 1024
          %760 = vsyncadd [#allocation20], %s759
          %s761 = sshll.u32 [#allocation21], 4
          %s762 = int_to_ptr.vmem [resolvable:$true] %s761
          %767 = dma.hbm_to_vmem [thread:$0]  %s10, 1024, %s762, [#allocation20], 64, 64, 4
        $region48: #{tpu_custom_call.1} parent=11 // pred_fallthru
          _
        // Predicated region
        $region49: #{tpu_custom_call.1} parent=11 // pred_check
          %p768 = pneg %p321
        $region50: #{tpu_custom_call.1} parent=11 // pred_check_branch
          %770 = sbr.rel (%p768) target = $region52
        $region51: #{tpu_custom_call.1} parent=11 // pred_region
          %s772 = ssub.s32 16, 16
          %773 = vsyncadd [#allocation23], %s772
          %s775 = sshll.u32 [#allocation22], 4
          %s776 = int_to_ptr.vmem [resolvable:$true] %s775
          %778 = dma.hbm_to_vmem [thread:$0]  %s11, 16, %s776, [#allocation23]
        $region52: #{tpu_custom_call.1} parent=11 // pred_fallthru
          _
        // Predicated region
        $region53: #{tpu_custom_call.1} parent=11 // pred_check
          %p779 = pneg %p342
        $region54: #{tpu_custom_call.1} parent=11 // pred_check_branch
          %781 = sbr.rel (%p779) target = $region56
        $region55: #{tpu_custom_call.1} parent=11 // pred_region
          %s783 = ssub.s32 1024, 1024
          %784 = vsyncadd [#allocation23], %s783
          %s785 = sshll.u32 [#allocation24], 4
          %s786 = int_to_ptr.vmem [resolvable:$true] %s785
          %791 = dma.hbm_to_vmem [thread:$0]  %s12, 1024, %s786, [#allocation23], 64, 64, 4
        $region56: #{tpu_custom_call.1} parent=11 // pred_fallthru
          _
        // Predicated region
        $region57: #{tpu_custom_call.1} parent=11 // pred_check
          %p792 = pneg %p363
        $region58: #{tpu_custom_call.1} parent=11 // pred_check_branch
          %794 = sbr.rel (%p792) target = $region60
        $region59: #{tpu_custom_call.1} parent=11 // pred_region
          %s796 = ssub.s32 16, 16
          %797 = vsyncadd [#allocation26], %s796
          %s799 = sshll.u32 [#allocation25], 4
          %s800 = int_to_ptr.vmem [resolvable:$true] %s799
          %802 = dma.hbm_to_vmem [thread:$0]  %s13, 16, %s800, [#allocation26]
        $region60: #{tpu_custom_call.1} parent=11 // pred_fallthru
          _
        // Predicated region
        $region61: #{tpu_custom_call.1} parent=11 // pred_check
          %p803 = pneg %p384
        $region62: #{tpu_custom_call.1} parent=11 // pred_check_branch
          %805 = sbr.rel (%p803) target = $region64
        $region63: #{tpu_custom_call.1} parent=11 // pred_region
          %s807 = ssub.s32 128, 128
          %808 = vsyncadd [#allocation26], %s807
          %s810 = sshll.u32 [#allocation27], 4
          %s811 = int_to_ptr.vmem [resolvable:$true] %s810
          %813 = dma.hbm_to_vmem [thread:$0]  %s14, 128, %s811, [#allocation26]
        $region64: #{tpu_custom_call.1} parent=11 // pred_fallthru
          _
        // Predicated region
        $region65: #{tpu_custom_call.1} parent=11 // pred_check
          %p814 = pneg %p405
        $region66: #{tpu_custom_call.1} parent=11 // pred_check_branch
          %816 = sbr.rel (%p814) target = $region68
        $region67: #{tpu_custom_call.1} parent=11 // pred_region
          %s818 = ssub.s32 1024, 1024
          %819 = vsyncadd [#allocation29], %s818
          %s820 = sshll.u32 [#allocation28], 4
          %s821 = int_to_ptr.vmem [resolvable:$true] %s820
          %826 = dma.hbm_to_vmem [thread:$0]  %s15, 1024, %s821, [#allocation29], 64, 64, 4
        $region68: #{tpu_custom_call.1} parent=11 // pred_fallthru
          _
        // Predicated region
        $region69: #{tpu_custom_call.1} parent=11 // pred_check
          %p827 = pneg %p426
        $region70: #{tpu_custom_call.1} parent=11 // pred_check_branch
          %829 = sbr.rel (%p827) target = $region72
        $region71: #{tpu_custom_call.1} parent=11 // pred_region
          %s831 = ssub.s32 16, 16
          %832 = vsyncadd [#allocation29], %s831
          %s834 = sshll.u32 [#allocation30], 4
          %s835 = int_to_ptr.vmem [resolvable:$true] %s834
          %837 = dma.hbm_to_vmem [thread:$0]  %s16, 16, %s835, [#allocation29]
        $region72: #{tpu_custom_call.1} parent=11 // pred_fallthru
          _
        // Predicated region
        $region73: #{tpu_custom_call.1} parent=11 // pred_check
          %p838 = pneg %p447
        $region74: #{tpu_custom_call.1} parent=11 // pred_check_branch
          %840 = sbr.rel (%p838) target = $region76
        $region75: #{tpu_custom_call.1} parent=11 // pred_region
          _
        $region76: #{tpu_custom_call.1} parent=11 // pred_fallthru
          _
        // Predicated region
        $region77: #{tpu_custom_call.1} parent=11 // pred_check
          %p841 = pneg %p468
        $region78: #{tpu_custom_call.1} parent=11 // pred_check_branch
          %843 = sbr.rel (%p841) target = $region80
        $region79: #{tpu_custom_call.1} parent=11 // pred_region
          %s845 = ssub.s32 16, 16
          %846 = vsyncadd [#allocation32], %s845
          %s848 = sshll.u32 [#allocation31], 4
          %s849 = int_to_ptr.vmem [resolvable:$true] %s848
          %851 = dma.hbm_to_vmem [thread:$0]  %s18, 16, %s849, [#allocation32]
        $region80: #{tpu_custom_call.1} parent=11 // pred_fallthru
          _
        // Predicated region
        $region81: #{tpu_custom_call.1} parent=11 // pred_check
          %p852 = pneg %p489
        $region82: #{tpu_custom_call.1} parent=11 // pred_check_branch
          %854 = sbr.rel (%p852) target = $region84
        $region83: #{tpu_custom_call.1} parent=11 // pred_region
          %s856 = ssub.s32 2048, 2048
          %857 = vsyncadd [#allocation32], %s856
          %s858 = sshll.u32 [#allocation33], 4
          %s859 = int_to_ptr.vmem [resolvable:$true] %s858
          %864 = dma.hbm_to_vmem [thread:$0]  %s19, 2048, %s859, [#allocation32], 128, 128, 8
        $region84: #{tpu_custom_call.1} parent=11 // pred_fallthru
          _
        // Predicated region
        $region85: #{tpu_custom_call.1} parent=11 // pred_check
          %p865 = pneg %p510
        $region86: #{tpu_custom_call.1} parent=11 // pred_check_branch
          %867 = sbr.rel (%p865) target = $region88
        $region87: #{tpu_custom_call.1} parent=11 // pred_region
          _
        $region88: #{tpu_custom_call.1} parent=11 // pred_fallthru
          _
      $region12: #{tpu_custom_call.1} parent=5 // pred_fallthru
        _
      %p868 = scmp.lt.s32.totalorder %s51, 4
      // Predicated region
      $region89: #{tpu_custom_call.1} parent=5 // pred_check
        %p869 = pneg %p868
      $region90: #{tpu_custom_call.1} parent=5 // pred_check_branch
        %871 = sbr.rel (%p869) target = $region92
      $region91: #{tpu_custom_call.1} parent=5 // pred_region
        // Predicated region
        $region93: #{tpu_custom_call.1} parent=91 // pred_check
          %p872 = pneg %p75
        $region94: #{tpu_custom_call.1} parent=91 // pred_check_branch
          %874 = sbr.rel (%p872) target = $region96
        $region95: #{tpu_custom_call.1} parent=91 // pred_region
          %s875 = sand.u32 %s65, 1
          %s876 = scalar_lea.sflag [#allocation5], %s875
          %s877 = sand.u32 %s65, 1
          %s878 = smul.addr %s877, 4
          %s879 = scalar_lea.vmem [#allocation4], %s878
          %p880 = scmp.lt.s32.totalorder %s51, 1
          %s881 = scalar_select %p880, %s51, 1
          %s883 = ssub.s32 64, 64
          %884 = vsyncadd %s876, %s883
          %s885 = smul.addr %s881, 64
          %s886 = scalar_lea.hbm %s0, %s885
          %s888 = sshll.u32 %s879, 4
          %s889 = int_to_ptr.vmem [resolvable:$true] %s888
          %891 = dma.hbm_to_vmem [thread:$0]  %s886, 64, %s889, %s876
        $region96: #{tpu_custom_call.1} parent=91 // pred_fallthru
          _
        // Predicated region
        $region97: #{tpu_custom_call.1} parent=91 // pred_check
          %p892 = pneg %p105
        $region98: #{tpu_custom_call.1} parent=91 // pred_check_branch
          %894 = sbr.rel (%p892) target = $region100
        $region99: #{tpu_custom_call.1} parent=91 // pred_region
          %s895 = sand.u32 %s51, 1
          %s896 = scalar_lea.sflag [#allocation8], %s895
          %s897 = sand.u32 %s95, 1
          %s898 = smul.addr %s897, 128
          %s899 = scalar_lea.vmem [#allocation7], %s898
          %p900 = scmp.lt.s32.totalorder %s51, 1
          %s901 = scalar_select %p900, %s51, 1
          %s902 = smul.u32 16, %s901
          %s904 = ssub.s32 2048, 2048
          %905 = vsyncadd %s896, %s904
          %s906 = smul.addr %s902, 2
          %s907 = smul.addr %s906, 64
          %s908 = scalar_lea.hbm %s1, %s907
          %s909 = sshll.u32 %s899, 4
          %s910 = int_to_ptr.vmem [resolvable:$true] %s909
          %915 = dma.hbm_to_vmem [thread:$0]  %s908, 2048, %s910, %s896, 128, 128, 8
        $region100: #{tpu_custom_call.1} parent=91 // pred_fallthru
          _
        // Predicated region
        $region101: #{tpu_custom_call.1} parent=91 // pred_check
          %p916 = pneg %p536
        $region102: #{tpu_custom_call.1} parent=91 // pred_check_branch
          %918 = sbr.rel (%p916) target = $region104
        $region103: #{tpu_custom_call.1} parent=91 // pred_region
          %s919 = sand.u32 %s526, 1
          %s920 = scalar_lea.sflag [#allocation35], %s919
          %s921 = sand.u32 %s526, 1
          %s922 = smul.addr %s921, 128
          %s923 = scalar_lea.vmem [#allocation34], %s922
          %s924 = ssub.s32 %s51, 2
          %p925 = scmp.gt.s32.totalorder %s924, 0
          %s926 = scalar_select %p925, %s924, 0
          %s928 = ssub.s32 2048, 2048
          %929 = vsyncadd %s920, %s928
          %s930 = smul.addr %s926, 64
          %s931 = scalar_lea.hbm %s21, %s930
          %s932 = sshll.u32 %s923, 4
          %s933 = int_to_ptr.vmem [resolvable:$true] %s932
          %938 = dma.hbm_to_vmem [thread:$0]  %s931, 2048, %s933, %s920, 128, 64, 4
        $region104: #{tpu_custom_call.1} parent=91 // pred_fallthru
          _
        // Predicated region
        $region105: #{tpu_custom_call.1} parent=91 // pred_check
          %p939 = pneg %p568
        $region106: #{tpu_custom_call.1} parent=91 // pred_check_branch
          %941 = sbr.rel (%p939) target = $region108
        $region107: #{tpu_custom_call.1} parent=91 // pred_region
          %s942 = ssub.s32 %s51, 2
          %p943 = scmp.gt.s32.totalorder %s942, 0
          %s944 = scalar_select %p943, %s942, 0
          %p945 = scmp.lt.s32.totalorder %s944, 1
          %s946 = scalar_select %p945, %s944, 1
          %s947 = scalar_lea.vmem %s22, %s946
          %s948 = ssub.s32 %s51, 2
          %p949 = scmp.gt.s32.totalorder %s948, 0
          %s950 = scalar_select %p949, %s948, 0
        $region108: #{tpu_custom_call.1} parent=91 // pred_fallthru
          _
      $region92: #{tpu_custom_call.1} parent=5 // pred_fallthru
        _
      %p951 = scmp.le.s32.totalorder 1, %s51
      %p952 = scmp.lt.s32.totalorder %s51, 5
      %p953 = pnand %p951, %p952
      %p954 = pneg %p953
      // Predicated region
      $region109: #{tpu_custom_call.1} parent=5 // pred_check
        _
      $region110: #{tpu_custom_call.1} parent=5 // pred_check_branch
        %956 = sbr.rel (%p953) target = $region112
      $region111: #{tpu_custom_call.1} parent=5 // pred_region
        %s957 = ssub.s32 %s51, 1
        %s958 = sand.u32 %s68, 1
        %s959 = scalar_lea.sflag [#allocation5], %s958
        %s960 = sand.u32 %s68, 1
        %s961 = smul.addr %s960, 4
        %s962 = scalar_lea.vmem [#allocation4], %s961
        // Predicated region
        $region113: #{tpu_custom_call.1} parent=111 // pred_check
          %p963 = pneg %p81
        $region114: #{tpu_custom_call.1} parent=111 // pred_check_branch
          %965 = sbr.rel (%p963) target = $region116
        $region115: #{tpu_custom_call.1} parent=111 // pred_region
          %966 = dma.done %s959, 64
        $region116: #{tpu_custom_call.1} parent=111 // pred_fallthru
          _
        %s967 = sand.u32 %s56, 1
        %s968 = scalar_lea.sflag [#allocation8], %s967
        %s969 = sand.u32 %s98, 1
        %s970 = smul.addr %s969, 128
        %s971 = scalar_lea.vmem [#allocation7], %s970
        // Predicated region
        $region117: #{tpu_custom_call.1} parent=111 // pred_check
          %p972 = pneg %p111
        $region118: #{tpu_custom_call.1} parent=111 // pred_check_branch
          %974 = sbr.rel (%p972) target = $region120
        $region119: #{tpu_custom_call.1} parent=111 // pred_region
          %975 = dma.done %s968, 2048
        $region120: #{tpu_custom_call.1} parent=111 // pred_fallthru
          _
        // Predicated region
        $region121: #{tpu_custom_call.1} parent=111 // pred_check
          %p976 = pneg %p132
        $region122: #{tpu_custom_call.1} parent=111 // pred_check_branch
          %978 = sbr.rel (%p976) target = $region124
        $region123: #{tpu_custom_call.1} parent=111 // pred_region
          %979 = dma.done [#allocation8], 32
        $region124: #{tpu_custom_call.1} parent=111 // pred_fallthru
          _
        // Predicated region
        $region125: #{tpu_custom_call.1} parent=111 // pred_check
          %p980 = pneg %p153
        $region126: #{tpu_custom_call.1} parent=111 // pred_check_branch
          %982 = sbr.rel (%p980) target = $region128
        $region127: #{tpu_custom_call.1} parent=111 // pred_region
          %983 = dma.done [#allocation11], 256
        $region128: #{tpu_custom_call.1} parent=111 // pred_fallthru
          _
        // Predicated region
        $region129: #{tpu_custom_call.1} parent=111 // pred_check
          %p984 = pneg %p174
        $region130: #{tpu_custom_call.1} parent=111 // pred_check_branch
          %986 = sbr.rel (%p984) target = $region132
        $region131: #{tpu_custom_call.1} parent=111 // pred_region
          %987 = dma.done [#allocation11], 2048
        $region132: #{tpu_custom_call.1} parent=111 // pred_fallthru
          _
        // Predicated region
        $region133: #{tpu_custom_call.1} parent=111 // pred_check
          %p988 = pneg %p195
        $region134: #{tpu_custom_call.1} parent=111 // pred_check_branch
          %990 = sbr.rel (%p988) target = $region136
        $region135: #{tpu_custom_call.1} parent=111 // pred_region
          %991 = dma.done [#allocation14], 16
        $region136: #{tpu_custom_call.1} parent=111 // pred_fallthru
          _
        // Predicated region
        $region137: #{tpu_custom_call.1} parent=111 // pred_check
          %p992 = pneg %p216
        $region138: #{tpu_custom_call.1} parent=111 // pred_check_branch
          %994 = sbr.rel (%p992) target = $region140
        $region139: #{tpu_custom_call.1} parent=111 // pred_region
          %995 = dma.done [#allocation14], 128
        $region140: #{tpu_custom_call.1} parent=111 // pred_fallthru
          _
        // Predicated region
        $region141: #{tpu_custom_call.1} parent=111 // pred_check
          %p996 = pneg %p237
        $region142: #{tpu_custom_call.1} parent=111 // pred_check_branch
          %998 = sbr.rel (%p996) target = $region144
        $region143: #{tpu_custom_call.1} parent=111 // pred_region
          %999 = dma.done [#allocation17], 1024
        $region144: #{tpu_custom_call.1} parent=111 // pred_fallthru
          _
        // Predicated region
        $region145: #{tpu_custom_call.1} parent=111 // pred_check
          %p1000 = pneg %p258
        $region146: #{tpu_custom_call.1} parent=111 // pred_check_branch
          %1002 = sbr.rel (%p1000) target = $region148
        $region147: #{tpu_custom_call.1} parent=111 // pred_region
          %1003 = dma.done [#allocation17], 16
        $region148: #{tpu_custom_call.1} parent=111 // pred_fallthru
          _
        // Predicated region
        $region149: #{tpu_custom_call.1} parent=111 // pred_check
          %p1004 = pneg %p279
        $region150: #{tpu_custom_call.1} parent=111 // pred_check_branch
          %1006 = sbr.rel (%p1004) target = $region152
        $region151: #{tpu_custom_call.1} parent=111 // pred_region
          %1007 = dma.done [#allocation20], 128
        $region152: #{tpu_custom_call.1} parent=111 // pred_fallthru
          _
        // Predicated region
        $region153: #{tpu_custom_call.1} parent=111 // pred_check
          %p1008 = pneg %p300
        $region154: #{tpu_custom_call.1} parent=111 // pred_check_branch
          %1010 = sbr.rel (%p1008) target = $region156
        $region155: #{tpu_custom_call.1} parent=111 // pred_region
          %1011 = dma.done [#allocation20], 1024
        $region156: #{tpu_custom_call.1} parent=111 // pred_fallthru
          _
        // Predicated region
        $region157: #{tpu_custom_call.1} parent=111 // pred_check
          %p1012 = pneg %p321
        $region158: #{tpu_custom_call.1} parent=111 // pred_check_branch
          %1014 = sbr.rel (%p1012) target = $region160
        $region159: #{tpu_custom_call.1} parent=111 // pred_region
          %1015 = dma.done [#allocation23], 16
        $region160: #{tpu_custom_call.1} parent=111 // pred_fallthru
          _
        // Predicated region
        $region161: #{tpu_custom_call.1} parent=111 // pred_check
          %p1016 = pneg %p342
        $region162: #{tpu_custom_call.1} parent=111 // pred_check_branch
          %1018 = sbr.rel (%p1016) target = $region164
        $region163: #{tpu_custom_call.1} parent=111 // pred_region
          %1019 = dma.done [#allocation23], 1024
        $region164: #{tpu_custom_call.1} parent=111 // pred_fallthru
          _
        // Predicated region
        $region165: #{tpu_custom_call.1} parent=111 // pred_check
          %p1020 = pneg %p363
        $region166: #{tpu_custom_call.1} parent=111 // pred_check_branch
          %1022 = sbr.rel (%p1020) target = $region168
        $region167: #{tpu_custom_call.1} parent=111 // pred_region
          %1023 = dma.done [#allocation26], 16
        $region168: #{tpu_custom_call.1} parent=111 // pred_fallthru
          _
        // Predicated region
        $region169: #{tpu_custom_call.1} parent=111 // pred_check
          %p1024 = pneg %p384
        $region170: #{tpu_custom_call.1} parent=111 // pred_check_branch
          %1026 = sbr.rel (%p1024) target = $region172
        $region171: #{tpu_custom_call.1} parent=111 // pred_region
          %1027 = dma.done [#allocation26], 128
        $region172: #{tpu_custom_call.1} parent=111 // pred_fallthru
          _
        // Predicated region
        $region173: #{tpu_custom_call.1} parent=111 // pred_check
          %p1028 = pneg %p405
        $region174: #{tpu_custom_call.1} parent=111 // pred_check_branch
          %1030 = sbr.rel (%p1028) target = $region176
        $region175: #{tpu_custom_call.1} parent=111 // pred_region
          %1031 = dma.done [#allocation29], 1024
        $region176: #{tpu_custom_call.1} parent=111 // pred_fallthru
          _
        // Predicated region
        $region177: #{tpu_custom_call.1} parent=111 // pred_check
          %p1032 = pneg %p426
        $region178: #{tpu_custom_call.1} parent=111 // pred_check_branch
          %1034 = sbr.rel (%p1032) target = $region180
        $region179: #{tpu_custom_call.1} parent=111 // pred_region
          %1035 = dma.done [#allocation29], 16
        $region180: #{tpu_custom_call.1} parent=111 // pred_fallthru
          _
        // Predicated region
        $region181: #{tpu_custom_call.1} parent=111 // pred_check
          %p1036 = pneg %p468
        $region182: #{tpu_custom_call.1} parent=111 // pred_check_branch
          %1038 = sbr.rel (%p1036) target = $region184
        $region183: #{tpu_custom_call.1} parent=111 // pred_region
          %1039 = dma.done [#allocation32], 16
        $region184: #{tpu_custom_call.1} parent=111 // pred_fallthru
          _
        // Predicated region
        $region185: #{tpu_custom_call.1} parent=111 // pred_check
          %p1040 = pneg %p489
        $region186: #{tpu_custom_call.1} parent=111 // pred_check_branch
          %1042 = sbr.rel (%p1040) target = $region188
        $region187: #{tpu_custom_call.1} parent=111 // pred_region
          %1043 = dma.done [#allocation32], 2048
        $region188: #{tpu_custom_call.1} parent=111 // pred_fallthru
          _
        %s1044 = sand.u32 %s529, 1
        %s1045 = scalar_lea.sflag [#allocation35], %s1044
        %s1046 = sand.u32 %s529, 1
        %s1047 = smul.addr %s1046, 128
        %s1048 = scalar_lea.vmem [#allocation34], %s1047
        // Predicated region
        $region189: #{tpu_custom_call.1} parent=111 // pred_check
          %p1049 = pneg %p542
        $region190: #{tpu_custom_call.1} parent=111 // pred_check_branch
          %1051 = sbr.rel (%p1049) target = $region192
        $region191: #{tpu_custom_call.1} parent=111 // pred_region
          %1052 = dma.done %s1045, 2048
        $region192: #{tpu_custom_call.1} parent=111 // pred_fallthru
          _
        %s1053 = sand.u32 %s68, 1
        %s1054 = scalar_lea.sflag [#allocation5], %s1053
        %s1055 = sand.u32 %s68, 1
        %s1056 = smul.addr %s1055, 4
        %s1057 = scalar_lea.vmem [#allocation4], %s1056
        %p1058 = pneg %p81
        %p1059 = pneg %p78
        %s1060 = sand.u32 %s56, 1
        %s1061 = scalar_lea.sflag [#allocation8], %s1060
        %s1062 = sand.u32 %s98, 1
        %s1063 = smul.addr %s1062, 128
        %s1064 = scalar_lea.vmem [#allocation7], %s1063
        %p1065 = pneg %p111
        %p1066 = pneg %p108
        %p1067 = pneg %p132
        %p1068 = pneg %p129
        %p1069 = pneg %p153
        %p1070 = pneg %p150
        %p1071 = pneg %p174
        %p1072 = pneg %p171
        %p1073 = pneg %p195
        %p1074 = pneg %p192
        %p1075 = pneg %p216
        %p1076 = pneg %p213
        %p1077 = pneg %p237
        %p1078 = pneg %p234
        %p1079 = pneg %p258
        %p1080 = pneg %p255
        %p1081 = pneg %p279
        %p1082 = pneg %p276
        %p1083 = pneg %p300
        %p1084 = pneg %p297
        %p1085 = pneg %p321
        %p1086 = pneg %p318
        %p1087 = pneg %p342
        %p1088 = pneg %p339
        %p1089 = pneg %p363
        %p1090 = pneg %p360
        %p1091 = pneg %p384
        %p1092 = pneg %p381
        %p1093 = pneg %p405
        %p1094 = pneg %p402
        %p1095 = pneg %p426
        %p1096 = pneg %p423
        %p1097 = pneg %p447
        %p1098 = pneg %p444
        %p1099 = pneg %p468
        %p1100 = pneg %p465
        %p1101 = pneg %p489
        %p1102 = pneg %p486
        %p1103 = pneg %p510
        %p1104 = pneg %p507
        %s1105 = sand.u32 %s529, 1
        %s1106 = scalar_lea.sflag [#allocation35], %s1105
        %s1107 = sand.u32 %s529, 1
        %s1108 = smul.addr %s1107, 128
        %s1109 = scalar_lea.vmem [#allocation34], %s1108
        %p1110 = pneg %p542
        %p1111 = pneg %p539
        %s1112 = ssub.s32 %s56, 2
        %p1113 = scmp.gt.s32.totalorder %s1112, 0
        %s1114 = scalar_select %p1113, %s1112, 0
        %p1115 = scmp.lt.s32.totalorder %s1114, 1
        %s1116 = scalar_select %p1115, %s1114, 1
        %s1117 = scalar_lea.vmem %s22, %s1116
        %p1118 = pneg %p574
        %p1119 = pneg %p571
        %p1120 = pneg %p595
        %p1121 = pneg %p592
        %p1122 = pneg %p616
        %p1123 = pneg %p613
        %p1124 = pneg %p648
        %p1125 = pneg %p645
        %s1126 = sand.u32 %s56, 1
        %s1127 = scalar_lea.sflag [#allocation6], %s1126
        %s1128 = sand.u32 %s635, 1
        %s1129 = smul.addr %s1128, 8
        %s1130 = scalar_lea.vmem [#allocation39], %s1129
        %p1131 = scmp.lt.s32.totalorder %s56, 1
        %s1132 = scalar_select %p1131, %s56, 1
        %p1133 = scmp.lt.s32.totalorder %s56, 1
        %s1134 = scalar_select %p1133, %s56, 1
        %s1135 = smul.u32 16, %s1134
        %s1136 = ssub.s32 %s56, 2
        %p1137 = scmp.gt.s32.totalorder %s1136, 0
        %s1138 = scalar_select %p1137, %s1136, 0
        %s1139 = ssub.s32 %s56, 2
        %p1140 = scmp.gt.s32.totalorder %s1139, 0
        %s1141 = scalar_select %p1140, %s1139, 0
        %p1142 = scmp.lt.s32.totalorder %s1141, 1
        %s1143 = scalar_select %p1142, %s1141, 1
        %s1144 = scalar_lea.vmem %s22, %s1143
        %s1145 = ssub.s32 %s56, 2
        %p1146 = scmp.gt.s32.totalorder %s1145, 0
        %s1147 = scalar_select %p1146, %s1145, 0
        %s1148 = ssub.s32 %s56, 2
        %p1149 = scmp.gt.s32.totalorder %s1148, 0
        %s1150 = scalar_select %p1149, %s1148, 0
        %p1152 = scmp.eq.s32.totalorder %s56, 0
        // Predicated region
        $region193: #{tpu_custom_call.1} parent=111 // pred_check
          %p1153 = pneg %p1152
        $region194: #{tpu_custom_call.1} parent=111 // pred_check_branch
          %1155 = sbr.rel (%p1153) target = $region196
        $region195: #{tpu_custom_call.1} parent=111 // pred_region
          %1156 = vst [vmem:[#allocation2] sm:$0xff] 0.0
          %1157 = vst [vmem:[#allocation2 + $0x8] sm:$0xff] 0.0
        $region196: #{tpu_custom_call.1} parent=111 // pred_fallthru
          _
        %p1158 = scmp.lt.s32.totalorder %s56, 2
        // Predicated region
        $region197: #{tpu_custom_call.1} parent=111 // pred_check
          %p1159 = pneg %p1158
        $region198: #{tpu_custom_call.1} parent=111 // pred_check_branch
          %1161 = sbr.rel (%p1159) target = $region200
        $region199: #{tpu_custom_call.1} parent=111 // pred_region
          %v1162 = vld [vmem:[#allocation2] sm:$0xff]
          %v1163 = vld [vmem:[#allocation2 + $0x8] sm:$0xff]
          %v1164 = vld [vmem:[%s962] sm:$0xf]
          %v1165 = vld [vmem:[%s971] sm:$0xff]
          %v1166 = vld [vmem:[%s971 + $0x8] sm:$0xff]
          %v1167 = vld [vmem:[%s971 + $0x10] sm:$0xff]
          %v1168 = vld [vmem:[%s971 + $0x18] sm:$0xff]
          %v1169 = vld [vmem:[%s971 + $0x20] sm:$0xff]
          %v1170 = vld [vmem:[%s971 + $0x28] sm:$0xff]
          %v1171 = vld [vmem:[%s971 + $0x30] sm:$0xff]
          %v1172 = vld [vmem:[%s971 + $0x38] sm:$0xff]
          %v1173 = vld [vmem:[%s971 + $0x40] sm:$0xff]
          %v1174 = vld [vmem:[%s971 + $0x48] sm:$0xff]
          %v1175 = vld [vmem:[%s971 + $0x50] sm:$0xff]
          %v1176 = vld [vmem:[%s971 + $0x58] sm:$0xff]
          %v1177 = vld [vmem:[%s971 + $0x60] sm:$0xff]
          %v1178 = vld [vmem:[%s971 + $0x68] sm:$0xff]
          %v1179 = vld [vmem:[%s971 + $0x70] sm:$0xff]
          %v1180 = vld [vmem:[%s971 + $0x78] sm:$0xff]
          %v1197 = vunpack.c.l.b16 %v1165
          %v1198 = vunpack.c.h.b16 %v1165
          %v1199 = vunpack.c.l.b16 %v1166
          %v1200 = vunpack.c.h.b16 %v1166
          %v1201 = vunpack.c.l.b16 %v1167
          %v1202 = vunpack.c.h.b16 %v1167
          %v1203 = vunpack.c.l.b16 %v1168
          %v1204 = vunpack.c.h.b16 %v1168
          %v1205 = vunpack.c.l.b16 %v1169
          %v1206 = vunpack.c.h.b16 %v1169
          %v1207 = vunpack.c.l.b16 %v1170
          %v1208 = vunpack.c.h.b16 %v1170
          %v1209 = vunpack.c.l.b16 %v1171
          %v1210 = vunpack.c.h.b16 %v1171
          %v1211 = vunpack.c.l.b16 %v1172
          %v1212 = vunpack.c.h.b16 %v1172
          %v1213 = vunpack.c.l.b16 %v1173
          %v1214 = vunpack.c.h.b16 %v1173
          %v1215 = vunpack.c.l.b16 %v1174
          %v1216 = vunpack.c.h.b16 %v1174
          %v1217 = vunpack.c.l.b16 %v1175
          %v1218 = vunpack.c.h.b16 %v1175
          %v1219 = vunpack.c.l.b16 %v1176
          %v1220 = vunpack.c.h.b16 %v1176
          %v1221 = vunpack.c.l.b16 %v1177
          %v1222 = vunpack.c.h.b16 %v1177
          %v1223 = vunpack.c.l.b16 %v1178
          %v1224 = vunpack.c.h.b16 %v1178
          %v1225 = vunpack.c.l.b16 %v1179
          %v1226 = vunpack.c.h.b16 %v1179
          %v1227 = vunpack.c.l.b16 %v1180
          %v1228 = vunpack.c.h.b16 %v1180
          %v1229 = vpack.c.b16 %v1199, %v1197
          %v1230 = vpack.c.b16 %v1200, %v1198
          %v1231 = vpack.c.b16 %v1203, %v1201
          %v1232 = vpack.c.b16 %v1204, %v1202
          %v1233 = vpack.c.b16 %v1207, %v1205
          %v1234 = vpack.c.b16 %v1208, %v1206
          %v1235 = vpack.c.b16 %v1211, %v1209
          %v1236 = vpack.c.b16 %v1212, %v1210
          %v1237 = vpack.c.b16 %v1215, %v1213
          %v1238 = vpack.c.b16 %v1216, %v1214
          %v1239 = vpack.c.b16 %v1219, %v1217
          %v1240 = vpack.c.b16 %v1220, %v1218
          %v1241 = vpack.c.b16 %v1223, %v1221
          %v1242 = vpack.c.b16 %v1224, %v1222
          %v1243 = vpack.c.b16 %v1227, %v1225
          %v1244 = vpack.c.b16 %v1228, %v1226
          %1261 = vmatprep.subr.bf16.mxu0 %v1230
          %1262 = vmatpush1.bf16.msra.mxu0 %v1229
          %1263 = vmatprep.subr.bf16.mxu0 %v1232
          %1264 = vmatpush1.bf16.msra.mxu0 %v1231
          %1265 = vmatprep.subr.bf16.mxu0 %v1234
          %1266 = vmatpush1.bf16.msra.mxu0 %v1233
          %1267 = vmatprep.subr.bf16.mxu0 %v1236
          %1268 = vmatpush1.bf16.msra.mxu0 %v1235
          %1269 = vmatprep.subr.bf16.mxu0 %v1238
          %1270 = vmatpush1.bf16.msra.mxu0 %v1237
          %1271 = vmatprep.subr.bf16.mxu0 %v1240
          %1272 = vmatpush1.bf16.msra.mxu0 %v1239
          %1273 = vmatprep.subr.bf16.mxu0 %v1242
          %1274 = vmatpush1.bf16.msra.mxu0 %v1241
          %1275 = vmatprep.subr.bf16.mxu0 %v1244
          %1276 = vmatpush1.bf16.msra.mxu0 %v1243
          %1277 = vmatprep.subr.bf16.mxu0 0
          %1278 = vmatpush1.bf16.msra.mxu0 0
          %1279 = vmatprep.subr.bf16.mxu0 0
          %1280 = vmatpush1.bf16.msra.mxu0 0
          %1281 = vmatprep.subr.bf16.mxu0 0
          %1282 = vmatpush1.bf16.msra.mxu0 0
          %1283 = vmatprep.subr.bf16.mxu0 0
          %1284 = vmatpush1.bf16.msra.mxu0 0
          %1285 = vmatprep.subr.bf16.mxu0 0
          %1286 = vmatpush1.bf16.msra.mxu0 0
          %1287 = vmatprep.subr.bf16.mxu0 0
          %1288 = vmatpush1.bf16.msra.mxu0 0
          %1289 = vmatprep.subr.bf16.mxu0 0
          %1290 = vmatpush1.bf16.msra.mxu0 0
          %1291 = vmatprep.subr.bf16.mxu0 0
          %1292 = vmatpush1.bf16.msra.mxu0 0
          %1293 = vmatprep.mubr.bf16.mxu0 0
          %1294 = vmatmul.mubr.bf16.gmra.mrb[0].mxu0 %v1164
          %v1295 = vpop.f32.mrb[0].mxu0
          %v1296 = vadd.f32 0.0, %v1295
          %v1297 = vpop.f32.mrb[0].mxu0
          %v1298 = vadd.f32 0.0, %v1297
          %v1299 = vpop.f32.mrb[0].mxu0
          %v1300 = vpop.f32.mrb[0].mxu0
          %1301 = vdwg.mxu0
          %v1302 = vadd.f32 %v1162, %v1296
          %v1303 = vadd.f32 %v1163, %v1298
          %1304 = vst [vmem:[#allocation2] sm:$0xff] %v1302
          %1305 = vst [vmem:[#allocation2 + $0x8] sm:$0xff] %v1303
        $region200: #{tpu_custom_call.1} parent=111 // pred_fallthru
          _
        %p1306 = scmp.eq.s32.totalorder %s56, 1
        // Predicated region
        $region201: #{tpu_custom_call.1} parent=111 // pred_check
          %p1307 = pneg %p1306
        $region202: #{tpu_custom_call.1} parent=111 // pred_check_branch
          %1309 = sbr.rel (%p1307) target = $region204
        $region203: #{tpu_custom_call.1} parent=111 // pred_region
          %v1310 = vld [vmem:[#allocation2] sm:$0xff]
          %v1311 = vld [vmem:[#allocation2 + $0x8] sm:$0xff]
          %v1312 = vld [vmem:[#allocation9] sm:$0x3]
          %v1314 = vlaneseq
          %v1315 = vshrl.u32 %v1314, 7
          %v1316 = vsub.s32 0, %v1315
          %v1317 = vrot.slane %v1312, %v1316
          %v1318 = vlaneseq
          %v1319 = vshrl.u32 %v1318, 7
          %v1320 = vsub.s32 1, %v1319
          %v1321 = vrot.slane %v1312, %v1320
          %v1324 = vadd.f32 %v1310, %v1317
          %v1325 = vadd.f32 %v1311, %v1321
          %vm1326 = vcmp.ge.f32.partialorder %v1324, 0.0
          %vm1327 = vcmp.ge.f32.partialorder %v1325, 0.0
          %v1328 = vmul.f32 %v1324, 0.5
          %v1329 = vmul.f32 %v1325, 0.5
          %v1330 = vsel %vm1326, %v1324, %v1328
          %v1331 = vsel %vm1327, %v1325, %v1329
          %v1332 = vld [vmem:[#allocation10] sm:$0xff]
          %v1333 = vld [vmem:[#allocation10 + $0x8] sm:$0xff]
          %v1334 = vmul.f32 %v1330, %v1332
          %v1335 = vmul.f32 %v1331, %v1333
          %v1336 = vpack.c.bf16 %v1334, %v1334
          %v1337 = vpack.c.bf16 %v1335, %v1335
          %v1338 = vld [vmem:[#allocation12] sm:$0xf]
          %v1339 = vld [vmem:[#allocation12 + $0x4] sm:$0xf]
          %v1340 = vld [vmem:[#allocation12 + $0x8] sm:$0xf]
          %v1341 = vld [vmem:[#allocation12 + $0xc] sm:$0xf]
          %v1342 = vld [vmem:[#allocation12 + $0x10] sm:$0xf]
          %v1343 = vld [vmem:[#allocation12 + $0x14] sm:$0xf]
          %v1344 = vld [vmem:[#allocation12 + $0x18] sm:$0xf]
          %v1345 = vld [vmem:[#allocation12 + $0x1c] sm:$0xf]
          %v1346 = vld [vmem:[#allocation12 + $0x20] sm:$0xf]
          %v1347 = vld [vmem:[#allocation12 + $0x24] sm:$0xf]
          %v1348 = vld [vmem:[#allocation12 + $0x28] sm:$0xf]
          %v1349 = vld [vmem:[#allocation12 + $0x2c] sm:$0xf]
          %v1350 = vld [vmem:[#allocation12 + $0x30] sm:$0xf]
          %v1351 = vld [vmem:[#allocation12 + $0x34] sm:$0xf]
          %v1352 = vld [vmem:[#allocation12 + $0x38] sm:$0xf]
          %v1353 = vld [vmem:[#allocation12 + $0x3c] sm:$0xf]
          %v1354 = vld [vmem:[#allocation12 + $0x40] sm:$0xf]
          %v1355 = vld [vmem:[#allocation12 + $0x44] sm:$0xf]
          %v1356 = vld [vmem:[#allocation12 + $0x48] sm:$0xf]
          %v1357 = vld [vmem:[#allocation12 + $0x4c] sm:$0xf]
          %v1358 = vld [vmem:[#allocation12 + $0x50] sm:$0xf]
          %v1359 = vld [vmem:[#allocation12 + $0x54] sm:$0xf]
          %v1360 = vld [vmem:[#allocation12 + $0x58] sm:$0xf]
          %v1361 = vld [vmem:[#allocation12 + $0x5c] sm:$0xf]
          %v1362 = vld [vmem:[#allocation12 + $0x60] sm:$0xf]
          %v1363 = vld [vmem:[#allocation12 + $0x64] sm:$0xf]
          %v1364 = vld [vmem:[#allocation12 + $0x68] sm:$0xf]
          %v1365 = vld [vmem:[#allocation12 + $0x6c] sm:$0xf]
          %v1366 = vld [vmem:[#allocation12 + $0x70] sm:$0xf]
          %v1367 = vld [vmem:[#allocation12 + $0x74] sm:$0xf]
          %v1368 = vld [vmem:[#allocation12 + $0x78] sm:$0xf]
          %v1369 = vld [vmem:[#allocation12 + $0x7c] sm:$0xf]
          %v1370 = vld [vmem:[#allocation13] sm:$0x1]
          %v1372 = vlaneseq
          %v1373 = vshrl.u32 %v1372, 7
          %v1374 = vsub.s32 0, %v1373
          %v1375 = vrot.slane %v1370, %v1374
          %v1409 = vunpack.c.l.b16 %v1338
          %v1410 = vunpack.c.l.b16 %v1339
          %v1411 = vunpack.c.l.b16 %v1340
          %v1412 = vunpack.c.l.b16 %v1341
          %v1413 = vunpack.c.l.b16 %v1342
          %v1414 = vunpack.c.l.b16 %v1343
          %v1415 = vunpack.c.l.b16 %v1344
          %v1416 = vunpack.c.l.b16 %v1345
          %v1417 = vunpack.c.l.b16 %v1346
          %v1418 = vunpack.c.l.b16 %v1347
          %v1419 = vunpack.c.l.b16 %v1348
          %v1420 = vunpack.c.l.b16 %v1349
          %v1421 = vunpack.c.l.b16 %v1350
          %v1422 = vunpack.c.l.b16 %v1351
          %v1423 = vunpack.c.l.b16 %v1352
          %v1424 = vunpack.c.l.b16 %v1353
          %v1425 = vunpack.c.l.b16 %v1354
          %v1426 = vunpack.c.l.b16 %v1355
          %v1427 = vunpack.c.l.b16 %v1356
          %v1428 = vunpack.c.l.b16 %v1357
          %v1429 = vunpack.c.l.b16 %v1358
          %v1430 = vunpack.c.l.b16 %v1359
          %v1431 = vunpack.c.l.b16 %v1360
          %v1432 = vunpack.c.l.b16 %v1361
          %v1433 = vunpack.c.l.b16 %v1362
          %v1434 = vunpack.c.l.b16 %v1363
          %v1435 = vunpack.c.l.b16 %v1364
          %v1436 = vunpack.c.l.b16 %v1365
          %v1437 = vunpack.c.l.b16 %v1366
          %v1438 = vunpack.c.l.b16 %v1367
          %v1439 = vunpack.c.l.b16 %v1368
          %v1440 = vunpack.c.l.b16 %v1369
          %v1441 = vpack.c.b16 %v1410, %v1409
          %v1442 = vpack.c.b16 %v1412, %v1411
          %v1443 = vpack.c.b16 %v1414, %v1413
          %v1444 = vpack.c.b16 %v1416, %v1415
          %v1445 = vpack.c.b16 %v1418, %v1417
          %v1446 = vpack.c.b16 %v1420, %v1419
          %v1447 = vpack.c.b16 %v1422, %v1421
          %v1448 = vpack.c.b16 %v1424, %v1423
          %v1449 = vpack.c.b16 %v1426, %v1425
          %v1450 = vpack.c.b16 %v1428, %v1427
          %v1451 = vpack.c.b16 %v1430, %v1429
          %v1452 = vpack.c.b16 %v1432, %v1431
          %v1453 = vpack.c.b16 %v1434, %v1433
          %v1454 = vpack.c.b16 %v1436, %v1435
          %v1455 = vpack.c.b16 %v1438, %v1437
          %v1456 = vpack.c.b16 %v1440, %v1439
          %1473 = vmatprep.subr.bf16.mxu0 0
          %1474 = vmatpush1.bf16.msra.mxu0 %v1441
          %1475 = vmatprep.subr.bf16.mxu0 0
          %1476 = vmatpush1.bf16.msra.mxu0 %v1442
          %1477 = vmatprep.subr.bf16.mxu0 0
          %1478 = vmatpush1.bf16.msra.mxu0 %v1443
          %1479 = vmatprep.subr.bf16.mxu0 0
          %1480 = vmatpush1.bf16.msra.mxu0 %v1444
          %1481 = vmatprep.subr.bf16.mxu0 0
          %1482 = vmatpush1.bf16.msra.mxu0 %v1445
          %1483 = vmatprep.subr.bf16.mxu0 0
          %1484 = vmatpush1.bf16.msra.mxu0 %v1446
          %1485 = vmatprep.subr.bf16.mxu0 0
          %1486 = vmatpush1.bf16.msra.mxu0 %v1447
          %1487 = vmatprep.subr.bf16.mxu0 0
          %1488 = vmatpush1.bf16.msra.mxu0 %v1448
          %1489 = vmatprep.subr.bf16.mxu0 0
          %1490 = vmatpush1.bf16.msra.mxu0 %v1449
          %1491 = vmatprep.subr.bf16.mxu0 0
          %1492 = vmatpush1.bf16.msra.mxu0 %v1450
          %1493 = vmatprep.subr.bf16.mxu0 0
          %1494 = vmatpush1.bf16.msra.mxu0 %v1451
          %1495 = vmatprep.subr.bf16.mxu0 0
          %1496 = vmatpush1.bf16.msra.mxu0 %v1452
          %1497 = vmatprep.subr.bf16.mxu0 0
          %1498 = vmatpush1.bf16.msra.mxu0 %v1453
          %1499 = vmatprep.subr.bf16.mxu0 0
          %1500 = vmatpush1.bf16.msra.mxu0 %v1454
          %1501 = vmatprep.subr.bf16.mxu0 0
          %1502 = vmatpush1.bf16.msra.mxu0 %v1455
          %1503 = vmatprep.subr.bf16.mxu0 0
          %1504 = vmatpush1.bf16.msra.mxu0 %v1456
          %1505 = vmatprep.mubr.bf16.mxu0 %v1337
          %1506 = vmatmul.mubr.bf16.gmra.mrb[0].mxu0 %v1336
          %v1507 = vpop.f32.mrb[0].mxu0
          %v1508 = vadd.f32 %v1375, %v1507
          %v1509 = vpop.f32.mrb[0].mxu0
          %v1510 = vpop.f32.mrb[0].mxu0
          %v1511 = vpop.f32.mrb[0].mxu0
          %1512 = vdwg.mxu0
          %vm1513 = vcmp.ge.f32.partialorder %v1508, 0.0
          %v1514 = vmul.f32 %v1508, 0.5
          %v1515 = vsel %vm1513, %v1508, %v1514
          %v1516 = vld [vmem:[#allocation15] sm:$0xff]
          %v1517 = vmul.f32 %v1515, %v1516
          %v1518 = vpack.c.bf16 %v1517, %v1517
          %v1519 = vld [vmem:[#allocation16] sm:$0xf]
          %v1520 = vld [vmem:[#allocation16 + $0x4] sm:$0xf]
          %v1521 = vld [vmem:[#allocation16 + $0x8] sm:$0xf]
          %v1522 = vld [vmem:[#allocation16 + $0xc] sm:$0xf]
          %v1523 = vld [vmem:[#allocation16 + $0x10] sm:$0xf]
          %v1524 = vld [vmem:[#allocation16 + $0x14] sm:$0xf]
          %v1525 = vld [vmem:[#allocation16 + $0x18] sm:$0xf]
          %v1526 = vld [vmem:[#allocation16 + $0x1c] sm:$0xf]
          %v1527 = vld [vmem:[#allocation16 + $0x20] sm:$0xf]
          %v1528 = vld [vmem:[#allocation16 + $0x24] sm:$0xf]
          %v1529 = vld [vmem:[#allocation16 + $0x28] sm:$0xf]
          %v1530 = vld [vmem:[#allocation16 + $0x2c] sm:$0xf]
          %v1531 = vld [vmem:[#allocation16 + $0x30] sm:$0xf]
          %v1532 = vld [vmem:[#allocation16 + $0x34] sm:$0xf]
          %v1533 = vld [vmem:[#allocation16 + $0x38] sm:$0xf]
          %v1534 = vld [vmem:[#allocation16 + $0x3c] sm:$0xf]
          %v1535 = vld [vmem:[#allocation18] sm:$0x1]
          %v1537 = vlaneseq
          %v1538 = vshrl.u32 %v1537, 7
          %v1539 = vsub.s32 0, %v1538
          %v1540 = vrot.slane %v1535, %v1539
          %v1558 = vunpack.c.l.b16 %v1519
          %v1559 = vunpack.c.l.b16 %v1520
          %v1560 = vunpack.c.l.b16 %v1521
          %v1561 = vunpack.c.l.b16 %v1522
          %v1562 = vunpack.c.l.b16 %v1523
          %v1563 = vunpack.c.l.b16 %v1524
          %v1564 = vunpack.c.l.b16 %v1525
          %v1565 = vunpack.c.l.b16 %v1526
          %v1566 = vunpack.c.l.b16 %v1527
          %v1567 = vunpack.c.l.b16 %v1528
          %v1568 = vunpack.c.l.b16 %v1529
          %v1569 = vunpack.c.l.b16 %v1530
          %v1570 = vunpack.c.l.b16 %v1531
          %v1571 = vunpack.c.l.b16 %v1532
          %v1572 = vunpack.c.l.b16 %v1533
          %v1573 = vunpack.c.l.b16 %v1534
          %v1574 = vpack.c.b16 %v1559, %v1558
          %v1575 = vpack.c.b16 %v1561, %v1560
          %v1576 = vpack.c.b16 %v1563, %v1562
          %v1577 = vpack.c.b16 %v1565, %v1564
          %v1578 = vpack.c.b16 %v1567, %v1566
          %v1579 = vpack.c.b16 %v1569, %v1568
          %v1580 = vpack.c.b16 %v1571, %v1570
          %v1581 = vpack.c.b16 %v1573, %v1572
          %1590 = vmatprep.subr.bf16.mxu0 0
          %1591 = vmatpush1.bf16.msra.mxu0 %v1574
          %1592 = vmatprep.subr.bf16.mxu0 0
          %1593 = vmatpush1.bf16.msra.mxu0 %v1575
          %1594 = vmatprep.subr.bf16.mxu0 0
          %1595 = vmatpush1.bf16.msra.mxu0 %v1576
          %1596 = vmatprep.subr.bf16.mxu0 0
          %1597 = vmatpush1.bf16.msra.mxu0 %v1577
          %1598 = vmatprep.subr.bf16.mxu0 0
          %1599 = vmatpush1.bf16.msra.mxu0 %v1578
          %1600 = vmatprep.subr.bf16.mxu0 0
          %1601 = vmatpush1.bf16.msra.mxu0 %v1579
          %1602 = vmatprep.subr.bf16.mxu0 0
          %1603 = vmatpush1.bf16.msra.mxu0 %v1580
          %1604 = vmatprep.subr.bf16.mxu0 0
          %1605 = vmatpush1.bf16.msra.mxu0 %v1581
          %1606 = vmatprep.subr.bf16.mxu0 0
          %1607 = vmatpush1.bf16.msra.mxu0 0
          %1608 = vmatprep.subr.bf16.mxu0 0
          %1609 = vmatpush1.bf16.msra.mxu0 0
          %1610 = vmatprep.subr.bf16.mxu0 0
          %1611 = vmatpush1.bf16.msra.mxu0 0
          %1612 = vmatprep.subr.bf16.mxu0 0
          %1613 = vmatpush1.bf16.msra.mxu0 0
          %1614 = vmatprep.subr.bf16.mxu0 0
          %1615 = vmatpush1.bf16.msra.mxu0 0
          %1616 = vmatprep.subr.bf16.mxu0 0
          %1617 = vmatpush1.bf16.msra.mxu0 0
          %1618 = vmatprep.subr.bf16.mxu0 0
          %1619 = vmatpush1.bf16.msra.mxu0 0
          %1620 = vmatprep.subr.bf16.mxu0 0
          %1621 = vmatpush1.bf16.msra.mxu0 0
          %1622 = vmatprep.mubr.bf16.mxu0 0
          %1623 = vmatmul.mubr.bf16.gmra.mrb[0].mxu0 %v1518
          %v1624 = vpop.f32.mrb[0].mxu0
          %v1625 = vadd.f32 %v1540, %v1624
          %v1626 = vpop.f32.mrb[0].mxu0
          %v1627 = vpop.f32.mrb[0].mxu0
          %v1628 = vpop.f32.mrb[0].mxu0
          %1629 = vdwg.mxu0
          %vm1630 = vcmp.ge.f32.partialorder %v1625, 0.0
          %v1631 = vmul.f32 %v1625, 0.5
          %v1632 = vsel %vm1630, %v1625, %v1631
          %v1633 = vld [vmem:[#allocation19] sm:$0xff]
          %v1634 = vmul.f32 %v1632, %v1633
          %v1635 = vpack.c.bf16 %v1634, %v1634
          %v1636 = vld [vmem:[#allocation21] sm:$0xf]
          %v1637 = vld [vmem:[#allocation21 + $0x4] sm:$0xf]
          %v1638 = vld [vmem:[#allocation21 + $0x8] sm:$0xf]
          %v1639 = vld [vmem:[#allocation21 + $0xc] sm:$0xf]
          %v1640 = vld [vmem:[#allocation21 + $0x10] sm:$0xf]
          %v1641 = vld [vmem:[#allocation21 + $0x14] sm:$0xf]
          %v1642 = vld [vmem:[#allocation21 + $0x18] sm:$0xf]
          %v1643 = vld [vmem:[#allocation21 + $0x1c] sm:$0xf]
          %v1644 = vld [vmem:[#allocation21 + $0x20] sm:$0xf]
          %v1645 = vld [vmem:[#allocation21 + $0x24] sm:$0xf]
          %v1646 = vld [vmem:[#allocation21 + $0x28] sm:$0xf]
          %v1647 = vld [vmem:[#allocation21 + $0x2c] sm:$0xf]
          %v1648 = vld [vmem:[#allocation21 + $0x30] sm:$0xf]
          %v1649 = vld [vmem:[#allocation21 + $0x34] sm:$0xf]
          %v1650 = vld [vmem:[#allocation21 + $0x38] sm:$0xf]
          %v1651 = vld [vmem:[#allocation21 + $0x3c] sm:$0xf]
          %v1652 = vld [vmem:[#allocation22] sm:$0x1]
          %v1654 = vlaneseq
          %v1655 = vshrl.u32 %v1654, 7
          %v1656 = vsub.s32 0, %v1655
          %v1657 = vrot.slane %v1652, %v1656
          %v1675 = vunpack.c.l.b16 %v1636
          %v1676 = vunpack.c.l.b16 %v1637
          %v1677 = vunpack.c.l.b16 %v1638
          %v1678 = vunpack.c.l.b16 %v1639
          %v1679 = vunpack.c.l.b16 %v1640
          %v1680 = vunpack.c.l.b16 %v1641
          %v1681 = vunpack.c.l.b16 %v1642
          %v1682 = vunpack.c.l.b16 %v1643
          %v1683 = vunpack.c.l.b16 %v1644
          %v1684 = vunpack.c.l.b16 %v1645
          %v1685 = vunpack.c.l.b16 %v1646
          %v1686 = vunpack.c.l.b16 %v1647
          %v1687 = vunpack.c.l.b16 %v1648
          %v1688 = vunpack.c.l.b16 %v1649
          %v1689 = vunpack.c.l.b16 %v1650
          %v1690 = vunpack.c.l.b16 %v1651
          %v1691 = vpack.c.b16 %v1676, %v1675
          %v1692 = vpack.c.b16 %v1678, %v1677
          %v1693 = vpack.c.b16 %v1680, %v1679
          %v1694 = vpack.c.b16 %v1682, %v1681
          %v1695 = vpack.c.b16 %v1684, %v1683
          %v1696 = vpack.c.b16 %v1686, %v1685
          %v1697 = vpack.c.b16 %v1688, %v1687
          %v1698 = vpack.c.b16 %v1690, %v1689
          %1707 = vmatprep.subr.bf16.mxu0 0
          %1708 = vmatpush1.bf16.msra.mxu0 %v1691
          %1709 = vmatprep.subr.bf16.mxu0 0
          %1710 = vmatpush1.bf16.msra.mxu0 %v1692
          %1711 = vmatprep.subr.bf16.mxu0 0
          %1712 = vmatpush1.bf16.msra.mxu0 %v1693
          %1713 = vmatprep.subr.bf16.mxu0 0
          %1714 = vmatpush1.bf16.msra.mxu0 %v1694
          %1715 = vmatprep.subr.bf16.mxu0 0
          %1716 = vmatpush1.bf16.msra.mxu0 %v1695
          %1717 = vmatprep.subr.bf16.mxu0 0
          %1718 = vmatpush1.bf16.msra.mxu0 %v1696
          %1719 = vmatprep.subr.bf16.mxu0 0
          %1720 = vmatpush1.bf16.msra.mxu0 %v1697
          %1721 = vmatprep.subr.bf16.mxu0 0
          %1722 = vmatpush1.bf16.msra.mxu0 %v1698
          %1723 = vmatprep.subr.bf16.mxu0 0
          %1724 = vmatpush1.bf16.msra.mxu0 0
          %1725 = vmatprep.subr.bf16.mxu0 0
          %1726 = vmatpush1.bf16.msra.mxu0 0
          %1727 = vmatprep.subr.bf16.mxu0 0
          %1728 = vmatpush1.bf16.msra.mxu0 0
          %1729 = vmatprep.subr.bf16.mxu0 0
          %1730 = vmatpush1.bf16.msra.mxu0 0
          %1731 = vmatprep.subr.bf16.mxu0 0
          %1732 = vmatpush1.bf16.msra.mxu0 0
          %1733 = vmatprep.subr.bf16.mxu0 0
          %1734 = vmatpush1.bf16.msra.mxu0 0
          %1735 = vmatprep.subr.bf16.mxu0 0
          %1736 = vmatpush1.bf16.msra.mxu0 0
          %1737 = vmatprep.subr.bf16.mxu0 0
          %1738 = vmatpush1.bf16.msra.mxu0 0
          %1739 = vmatprep.mubr.bf16.mxu0 0
          %1740 = vmatmul.mubr.bf16.gmra.mrb[0].mxu0 %v1635
          %v1741 = vpop.f32.mrb[0].mxu0
          %v1742 = vadd.f32 %v1657, %v1741
          %v1743 = vpop.f32.mrb[0].mxu0
          %v1744 = vpop.f32.mrb[0].mxu0
          %v1745 = vpop.f32.mrb[0].mxu0
          %1746 = vdwg.mxu0
          %v1747 = vld [vmem:[#allocation24] sm:$0xf]
          %v1748 = vld [vmem:[#allocation24 + $0x4] sm:$0xf]
          %v1749 = vld [vmem:[#allocation24 + $0x8] sm:$0xf]
          %v1750 = vld [vmem:[#allocation24 + $0xc] sm:$0xf]
          %v1751 = vld [vmem:[#allocation24 + $0x10] sm:$0xf]
          %v1752 = vld [vmem:[#allocation24 + $0x14] sm:$0xf]
          %v1753 = vld [vmem:[#allocation24 + $0x18] sm:$0xf]
          %v1754 = vld [vmem:[#allocation24 + $0x1c] sm:$0xf]
          %v1755 = vld [vmem:[#allocation24 + $0x20] sm:$0xf]
          %v1756 = vld [vmem:[#allocation24 + $0x24] sm:$0xf]
          %v1757 = vld [vmem:[#allocation24 + $0x28] sm:$0xf]
          %v1758 = vld [vmem:[#allocation24 + $0x2c] sm:$0xf]
          %v1759 = vld [vmem:[#allocation24 + $0x30] sm:$0xf]
          %v1760 = vld [vmem:[#allocation24 + $0x34] sm:$0xf]
          %v1761 = vld [vmem:[#allocation24 + $0x38] sm:$0xf]
          %v1762 = vld [vmem:[#allocation24 + $0x3c] sm:$0xf]
          %v1763 = vld [vmem:[#allocation25] sm:$0x1]
          %v1765 = vlaneseq
          %v1766 = vshrl.u32 %v1765, 7
          %v1767 = vsub.s32 0, %v1766
          %v1768 = vrot.slane %v1763, %v1767
          %v1786 = vunpack.c.l.b16 %v1747
          %v1787 = vunpack.c.l.b16 %v1748
          %v1788 = vunpack.c.l.b16 %v1749
          %v1789 = vunpack.c.l.b16 %v1750
          %v1790 = vunpack.c.l.b16 %v1751
          %v1791 = vunpack.c.l.b16 %v1752
          %v1792 = vunpack.c.l.b16 %v1753
          %v1793 = vunpack.c.l.b16 %v1754
          %v1794 = vunpack.c.l.b16 %v1755
          %v1795 = vunpack.c.l.b16 %v1756
          %v1796 = vunpack.c.l.b16 %v1757
          %v1797 = vunpack.c.l.b16 %v1758
          %v1798 = vunpack.c.l.b16 %v1759
          %v1799 = vunpack.c.l.b16 %v1760
          %v1800 = vunpack.c.l.b16 %v1761
          %v1801 = vunpack.c.l.b16 %v1762
          %v1802 = vpack.c.b16 %v1787, %v1786
          %v1803 = vpack.c.b16 %v1789, %v1788
          %v1804 = vpack.c.b16 %v1791, %v1790
          %v1805 = vpack.c.b16 %v1793, %v1792
          %v1806 = vpack.c.b16 %v1795, %v1794
          %v1807 = vpack.c.b16 %v1797, %v1796
          %v1808 = vpack.c.b16 %v1799, %v1798
          %v1809 = vpack.c.b16 %v1801, %v1800
          %1818 = vmatprep.subr.bf16.mxu0 0
          %1819 = vmatpush1.bf16.msra.mxu0 %v1802
          %1820 = vmatprep.subr.bf16.mxu0 0
          %1821 = vmatpush1.bf16.msra.mxu0 %v1803
          %1822 = vmatprep.subr.bf16.mxu0 0
          %1823 = vmatpush1.bf16.msra.mxu0 %v1804
          %1824 = vmatprep.subr.bf16.mxu0 0
          %1825 = vmatpush1.bf16.msra.mxu0 %v1805
          %1826 = vmatprep.subr.bf16.mxu0 0
          %1827 = vmatpush1.bf16.msra.mxu0 %v1806
          %1828 = vmatprep.subr.bf16.mxu0 0
          %1829 = vmatpush1.bf16.msra.mxu0 %v1807
          %1830 = vmatprep.subr.bf16.mxu0 0
          %1831 = vmatpush1.bf16.msra.mxu0 %v1808
          %1832 = vmatprep.subr.bf16.mxu0 0
          %1833 = vmatpush1.bf16.msra.mxu0 %v1809
          %1834 = vmatprep.subr.bf16.mxu0 0
          %1835 = vmatpush1.bf16.msra.mxu0 0
          %1836 = vmatprep.subr.bf16.mxu0 0
          %1837 = vmatpush1.bf16.msra.mxu0 0
          %1838 = vmatprep.subr.bf16.mxu0 0
          %1839 = vmatpush1.bf16.msra.mxu0 0
          %1840 = vmatprep.subr.bf16.mxu0 0
          %1841 = vmatpush1.bf16.msra.mxu0 0
          %1842 = vmatprep.subr.bf16.mxu0 0
          %1843 = vmatpush1.bf16.msra.mxu0 0
          %1844 = vmatprep.subr.bf16.mxu0 0
          %1845 = vmatpush1.bf16.msra.mxu0 0
          %1846 = vmatprep.subr.bf16.mxu0 0
          %1847 = vmatpush1.bf16.msra.mxu0 0
          %1848 = vmatprep.subr.bf16.mxu0 0
          %1849 = vmatpush1.bf16.msra.mxu0 0
          %1850 = vmatprep.mubr.bf16.mxu0 0
          %1851 = vmatmul.mubr.bf16.gmra.mrb[0].mxu0 %v1635
          %v1852 = vpop.f32.mrb[0].mxu0
          %v1853 = vadd.f32 %v1768, %v1852
          %v1854 = vpop.f32.mrb[0].mxu0
          %v1855 = vpop.f32.mrb[0].mxu0
          %v1856 = vpop.f32.mrb[0].mxu0
          %1857 = vdwg.mxu0
          %v1858 = vmul.f32 %v1853, 0.5
          %v1859 = vmul.f32 %v1858, 1.442695
          %v1860 = vpow.pop %v1859
          %v1861 = vld [vmem:[#allocation27] sm:$0xff]
          %v1862 = vmul.f32 %v1860, %v1861
          %v1863 = vadd.f32 %v1742, %v1862
          %v1864 = vpack.c.bf16 %v1863, %v1863
          %v1865 = vld [vmem:[#allocation28] sm:$0xf]
          %v1866 = vld [vmem:[#allocation28 + $0x4] sm:$0xf]
          %v1867 = vld [vmem:[#allocation28 + $0x8] sm:$0xf]
          %v1868 = vld [vmem:[#allocation28 + $0xc] sm:$0xf]
          %v1869 = vld [vmem:[#allocation28 + $0x10] sm:$0xf]
          %v1870 = vld [vmem:[#allocation28 + $0x14] sm:$0xf]
          %v1871 = vld [vmem:[#allocation28 + $0x18] sm:$0xf]
          %v1872 = vld [vmem:[#allocation28 + $0x1c] sm:$0xf]
          %v1873 = vld [vmem:[#allocation28 + $0x20] sm:$0xf]
          %v1874 = vld [vmem:[#allocation28 + $0x24] sm:$0xf]
          %v1875 = vld [vmem:[#allocation28 + $0x28] sm:$0xf]
          %v1876 = vld [vmem:[#allocation28 + $0x2c] sm:$0xf]
          %v1877 = vld [vmem:[#allocation28 + $0x30] sm:$0xf]
          %v1878 = vld [vmem:[#allocation28 + $0x34] sm:$0xf]
          %v1879 = vld [vmem:[#allocation28 + $0x38] sm:$0xf]
          %v1880 = vld [vmem:[#allocation28 + $0x3c] sm:$0xf]
          %v1881 = vld [vmem:[#allocation30] sm:$0x1]
          %v1883 = vlaneseq
          %v1884 = vshrl.u32 %v1883, 7
          %v1885 = vsub.s32 0, %v1884
          %v1886 = vrot.slane %v1881, %v1885
          %v1904 = vunpack.c.l.b16 %v1865
          %v1905 = vunpack.c.l.b16 %v1866
          %v1906 = vunpack.c.l.b16 %v1867
          %v1907 = vunpack.c.l.b16 %v1868
          %v1908 = vunpack.c.l.b16 %v1869
          %v1909 = vunpack.c.l.b16 %v1870
          %v1910 = vunpack.c.l.b16 %v1871
          %v1911 = vunpack.c.l.b16 %v1872
          %v1912 = vunpack.c.l.b16 %v1873
          %v1913 = vunpack.c.l.b16 %v1874
          %v1914 = vunpack.c.l.b16 %v1875
          %v1915 = vunpack.c.l.b16 %v1876
          %v1916 = vunpack.c.l.b16 %v1877
          %v1917 = vunpack.c.l.b16 %v1878
          %v1918 = vunpack.c.l.b16 %v1879
          %v1919 = vunpack.c.l.b16 %v1880
          %v1920 = vpack.c.b16 %v1905, %v1904
          %v1921 = vpack.c.b16 %v1907, %v1906
          %v1922 = vpack.c.b16 %v1909, %v1908
          %v1923 = vpack.c.b16 %v1911, %v1910
          %v1924 = vpack.c.b16 %v1913, %v1912
          %v1925 = vpack.c.b16 %v1915, %v1914
          %v1926 = vpack.c.b16 %v1917, %v1916
          %v1927 = vpack.c.b16 %v1919, %v1918
          %1936 = vmatprep.subr.bf16.mxu0 0
          %1937 = vmatpush1.bf16.msra.mxu0 %v1920
          %1938 = vmatprep.subr.bf16.mxu0 0
          %1939 = vmatpush1.bf16.msra.mxu0 %v1921
          %1940 = vmatprep.subr.bf16.mxu0 0
          %1941 = vmatpush1.bf16.msra.mxu0 %v1922
          %1942 = vmatprep.subr.bf16.mxu0 0
          %1943 = vmatpush1.bf16.msra.mxu0 %v1923
          %1944 = vmatprep.subr.bf16.mxu0 0
          %1945 = vmatpush1.bf16.msra.mxu0 %v1924
          %1946 = vmatprep.subr.bf16.mxu0 0
          %1947 = vmatpush1.bf16.msra.mxu0 %v1925
          %1948 = vmatprep.subr.bf16.mxu0 0
          %1949 = vmatpush1.bf16.msra.mxu0 %v1926
          %1950 = vmatprep.subr.bf16.mxu0 0
          %1951 = vmatpush1.bf16.msra.mxu0 %v1927
          %1952 = vmatprep.subr.bf16.mxu0 0
          %1953 = vmatpush1.bf16.msra.mxu0 0
          %1954 = vmatprep.subr.bf16.mxu0 0
          %1955 = vmatpush1.bf16.msra.mxu0 0
          %1956 = vmatprep.subr.bf16.mxu0 0
          %1957 = vmatpush1.bf16.msra.mxu0 0
          %1958 = vmatprep.subr.bf16.mxu0 0
          %1959 = vmatpush1.bf16.msra.mxu0 0
          %1960 = vmatprep.subr.bf16.mxu0 0
          %1961 = vmatpush1.bf16.msra.mxu0 0
          %1962 = vmatprep.subr.bf16.mxu0 0
          %1963 = vmatpush1.bf16.msra.mxu0 0
          %1964 = vmatprep.subr.bf16.mxu0 0
          %1965 = vmatpush1.bf16.msra.mxu0 0
          %1966 = vmatprep.subr.bf16.mxu0 0
          %1967 = vmatpush1.bf16.msra.mxu0 0
          %1968 = vmatprep.mubr.bf16.mxu0 0
          %1969 = vmatmul.mubr.bf16.gmra.mrb[0].mxu0 %v1864
          %v1970 = vpop.f32.mrb[0].mxu0
          %v1971 = vadd.f32 %v1886, %v1970
          %v1972 = vpop.f32.mrb[0].mxu0
          %v1973 = vpop.f32.mrb[0].mxu0
          %v1974 = vpop.f32.mrb[0].mxu0
          %1975 = vdwg.mxu0
          %v1976 = vmax.f32 %v1971, 0.0
          %v1977 = vpack.c.bf16 %v1976, %v1976
          %v1978 = vld [vmem:[%s17] sm:$0xf]
          %v1979 = vld [vmem:[%s17 + $0x4] sm:$0xf]
          %v1980 = vld [vmem:[%s17 + $0x8] sm:$0xf]
          %v1981 = vld [vmem:[%s17 + $0xc] sm:$0xf]
          %v1982 = vld [vmem:[%s17 + $0x10] sm:$0xf]
          %v1983 = vld [vmem:[%s17 + $0x14] sm:$0xf]
          %v1984 = vld [vmem:[%s17 + $0x18] sm:$0xf]
          %v1985 = vld [vmem:[%s17 + $0x1c] sm:$0xf]
          %v1986 = vld [vmem:[%s17 + $0x20] sm:$0xf]
          %v1987 = vld [vmem:[%s17 + $0x24] sm:$0xf]
          %v1988 = vld [vmem:[%s17 + $0x28] sm:$0xf]
          %v1989 = vld [vmem:[%s17 + $0x2c] sm:$0xf]
          %v1990 = vld [vmem:[%s17 + $0x30] sm:$0xf]
          %v1991 = vld [vmem:[%s17 + $0x34] sm:$0xf]
          %v1992 = vld [vmem:[%s17 + $0x38] sm:$0xf]
          %v1993 = vld [vmem:[%s17 + $0x3c] sm:$0xf]
          %v1994 = vld [vmem:[#allocation31] sm:$0x1]
          %v1996 = vlaneseq
          %v1997 = vshrl.u32 %v1996, 7
          %v1998 = vsub.s32 0, %v1997
          %v1999 = vrot.slane %v1994, %v1998
          %v2017 = vunpack.c.l.b16 %v1978
          %v2018 = vunpack.c.l.b16 %v1979
          %v2019 = vunpack.c.l.b16 %v1980
          %v2020 = vunpack.c.l.b16 %v1981
          %v2021 = vunpack.c.l.b16 %v1982
          %v2022 = vunpack.c.l.b16 %v1983
          %v2023 = vunpack.c.l.b16 %v1984
          %v2024 = vunpack.c.l.b16 %v1985
          %v2025 = vunpack.c.l.b16 %v1986
          %v2026 = vunpack.c.l.b16 %v1987
          %v2027 = vunpack.c.l.b16 %v1988
          %v2028 = vunpack.c.l.b16 %v1989
          %v2029 = vunpack.c.l.b16 %v1990
          %v2030 = vunpack.c.l.b16 %v1991
          %v2031 = vunpack.c.l.b16 %v1992
          %v2032 = vunpack.c.l.b16 %v1993
          %v2033 = vpack.c.b16 %v2018, %v2017
          %v2034 = vpack.c.b16 %v2020, %v2019
          %v2035 = vpack.c.b16 %v2022, %v2021
          %v2036 = vpack.c.b16 %v2024, %v2023
          %v2037 = vpack.c.b16 %v2026, %v2025
          %v2038 = vpack.c.b16 %v2028, %v2027
          %v2039 = vpack.c.b16 %v2030, %v2029
          %v2040 = vpack.c.b16 %v2032, %v2031
          %2049 = vmatprep.subr.bf16.mxu0 0
          %2050 = vmatpush1.bf16.msra.mxu0 %v2033
          %2051 = vmatprep.subr.bf16.mxu0 0
          %2052 = vmatpush1.bf16.msra.mxu0 %v2034
          %2053 = vmatprep.subr.bf16.mxu0 0
          %2054 = vmatpush1.bf16.msra.mxu0 %v2035
          %2055 = vmatprep.subr.bf16.mxu0 0
          %2056 = vmatpush1.bf16.msra.mxu0 %v2036
          %2057 = vmatprep.subr.bf16.mxu0 0
          %2058 = vmatpush1.bf16.msra.mxu0 %v2037
          %2059 = vmatprep.subr.bf16.mxu0 0
          %2060 = vmatpush1.bf16.msra.mxu0 %v2038
          %2061 = vmatprep.subr.bf16.mxu0 0
          %2062 = vmatpush1.bf16.msra.mxu0 %v2039
          %2063 = vmatprep.subr.bf16.mxu0 0
          %2064 = vmatpush1.bf16.msra.mxu0 %v2040
          %2065 = vmatprep.subr.bf16.mxu0 0
          %2066 = vmatpush1.bf16.msra.mxu0 0
          %2067 = vmatprep.subr.bf16.mxu0 0
          %2068 = vmatpush1.bf16.msra.mxu0 0
          %2069 = vmatprep.subr.bf16.mxu0 0
          %2070 = vmatpush1.bf16.msra.mxu0 0
          %2071 = vmatprep.subr.bf16.mxu0 0
          %2072 = vmatpush1.bf16.msra.mxu0 0
          %2073 = vmatprep.subr.bf16.mxu0 0
          %2074 = vmatpush1.bf16.msra.mxu0 0
          %2075 = vmatprep.subr.bf16.mxu0 0
          %2076 = vmatpush1.bf16.msra.mxu0 0
          %2077 = vmatprep.subr.bf16.mxu0 0
          %2078 = vmatpush1.bf16.msra.mxu0 0
          %2079 = vmatprep.subr.bf16.mxu0 0
          %2080 = vmatpush1.bf16.msra.mxu0 0
          %2081 = vmatprep.mubr.bf16.mxu0 0
          %2082 = vmatmul.mubr.bf16.gmra.mrb[0].mxu0 %v1977
          %v2083 = vpop.f32.mrb[0].mxu0
          %v2084 = vadd.f32 %v1999, %v2083
          %v2085 = vpop.f32.mrb[0].mxu0
          %v2086 = vpop.f32.mrb[0].mxu0
          %v2087 = vpop.f32.mrb[0].mxu0
          %2088 = vdwg.mxu0
          %v2089 = vmax.f32 %v2084, 0.0
          %v2090 = vpack.c.bf16 %v2089, %v2089
          %v2091 = vld [vmem:[#allocation33] sm:$0xff]
          %v2092 = vld [vmem:[#allocation33 + $0x8] sm:$0xff]
          %v2093 = vld [vmem:[#allocation33 + $0x10] sm:$0xff]
          %v2094 = vld [vmem:[#allocation33 + $0x18] sm:$0xff]
          %v2095 = vld [vmem:[#allocation33 + $0x20] sm:$0xff]
          %v2096 = vld [vmem:[#allocation33 + $0x28] sm:$0xff]
          %v2097 = vld [vmem:[#allocation33 + $0x30] sm:$0xff]
          %v2098 = vld [vmem:[#allocation33 + $0x38] sm:$0xff]
          %v2099 = vld [vmem:[#allocation33 + $0x40] sm:$0xff]
          %v2100 = vld [vmem:[#allocation33 + $0x48] sm:$0xff]
          %v2101 = vld [vmem:[#allocation33 + $0x50] sm:$0xff]
          %v2102 = vld [vmem:[#allocation33 + $0x58] sm:$0xff]
          %v2103 = vld [vmem:[#allocation33 + $0x60] sm:$0xff]
          %v2104 = vld [vmem:[#allocation33 + $0x68] sm:$0xff]
          %v2105 = vld [vmem:[#allocation33 + $0x70] sm:$0xff]
          %v2106 = vld [vmem:[#allocation33 + $0x78] sm:$0xff]
          %v2107 = vld [vmem:[%s20] sm:$0x3]
          %v2109 = vlaneseq
          %v2110 = vshrl.u32 %v2109, 7
          %v2111 = vsub.s32 0, %v2110
          %v2112 = vrot.slane %v2107, %v2111
          %v2113 = vlaneseq
          %v2114 = vshrl.u32 %v2113, 7
          %v2115 = vsub.s32 1, %v2114
          %v2116 = vrot.slane %v2107, %v2115
          %v2135 = vunpack.c.l.b16 %v2091
          %v2136 = vunpack.c.h.b16 %v2091
          %v2137 = vunpack.c.l.b16 %v2092
          %v2138 = vunpack.c.h.b16 %v2092
          %v2139 = vunpack.c.l.b16 %v2093
          %v2140 = vunpack.c.h.b16 %v2093
          %v2141 = vunpack.c.l.b16 %v2094
          %v2142 = vunpack.c.h.b16 %v2094
          %v2143 = vunpack.c.l.b16 %v2095
          %v2144 = vunpack.c.h.b16 %v2095
          %v2145 = vunpack.c.l.b16 %v2096
          %v2146 = vunpack.c.h.b16 %v2096
          %v2147 = vunpack.c.l.b16 %v2097
          %v2148 = vunpack.c.h.b16 %v2097
          %v2149 = vunpack.c.l.b16 %v2098
          %v2150 = vunpack.c.h.b16 %v2098
          %v2151 = vunpack.c.l.b16 %v2099
          %v2152 = vunpack.c.h.b16 %v2099
          %v2153 = vunpack.c.l.b16 %v2100
          %v2154 = vunpack.c.h.b16 %v2100
          %v2155 = vunpack.c.l.b16 %v2101
          %v2156 = vunpack.c.h.b16 %v2101
          %v2157 = vunpack.c.l.b16 %v2102
          %v2158 = vunpack.c.h.b16 %v2102
          %v2159 = vunpack.c.l.b16 %v2103
          %v2160 = vunpack.c.h.b16 %v2103
          %v2161 = vunpack.c.l.b16 %v2104
          %v2162 = vunpack.c.h.b16 %v2104
          %v2163 = vunpack.c.l.b16 %v2105
          %v2164 = vunpack.c.h.b16 %v2105
          %v2165 = vunpack.c.l.b16 %v2106
          %v2166 = vunpack.c.h.b16 %v2106
          %v2167 = vpack.c.b16 %v2137, %v2135
          %v2168 = vpack.c.b16 %v2138, %v2136
          %v2169 = vpack.c.b16 %v2141, %v2139
          %v2170 = vpack.c.b16 %v2142, %v2140
          %v2171 = vpack.c.b16 %v2145, %v2143
          %v2172 = vpack.c.b16 %v2146, %v2144
          %v2173 = vpack.c.b16 %v2149, %v2147
          %v2174 = vpack.c.b16 %v2150, %v2148
          %v2175 = vpack.c.b16 %v2153, %v2151
          %v2176 = vpack.c.b16 %v2154, %v2152
          %v2177 = vpack.c.b16 %v2157, %v2155
          %v2178 = vpack.c.b16 %v2158, %v2156
          %v2179 = vpack.c.b16 %v2161, %v2159
          %v2180 = vpack.c.b16 %v2162, %v2160
          %v2181 = vpack.c.b16 %v2165, %v2163
          %v2182 = vpack.c.b16 %v2166, %v2164
          %2199 = vmatprep.subr.bf16.mxu0 %v2168
          %2200 = vmatpush1.bf16.msra.mxu0 %v2167
          %2201 = vmatprep.subr.bf16.mxu0 %v2170
          %2202 = vmatpush1.bf16.msra.mxu0 %v2169
          %2203 = vmatprep.subr.bf16.mxu0 %v2172
          %2204 = vmatpush1.bf16.msra.mxu0 %v2171
          %2205 = vmatprep.subr.bf16.mxu0 %v2174
          %2206 = vmatpush1.bf16.msra.mxu0 %v2173
          %2207 = vmatprep.subr.bf16.mxu0 %v2176
          %2208 = vmatpush1.bf16.msra.mxu0 %v2175
          %2209 = vmatprep.subr.bf16.mxu0 %v2178
          %2210 = vmatpush1.bf16.msra.mxu0 %v2177
          %2211 = vmatprep.subr.bf16.mxu0 %v2180
          %2212 = vmatpush1.bf16.msra.mxu0 %v2179
          %2213 = vmatprep.subr.bf16.mxu0 %v2182
          %2214 = vmatpush1.bf16.msra.mxu0 %v2181
          %2215 = vmatprep.subr.bf16.mxu0 0
          %2216 = vmatpush1.bf16.msra.mxu0 0
          %2217 = vmatprep.subr.bf16.mxu0 0
          %2218 = vmatpush1.bf16.msra.mxu0 0
          %2219 = vmatprep.subr.bf16.mxu0 0
          %2220 = vmatpush1.bf16.msra.mxu0 0
          %2221 = vmatprep.subr.bf16.mxu0 0
          %2222 = vmatpush1.bf16.msra.mxu0 0
          %2223 = vmatprep.subr.bf16.mxu0 0
          %2224 = vmatpush1.bf16.msra.mxu0 0
          %2225 = vmatprep.subr.bf16.mxu0 0
          %2226 = vmatpush1.bf16.msra.mxu0 0
          %2227 = vmatprep.subr.bf16.mxu0 0
          %2228 = vmatpush1.bf16.msra.mxu0 0
          %2229 = vmatprep.subr.bf16.mxu0 0
          %2230 = vmatpush1.bf16.msra.mxu0 0
          %2231 = vmatprep.mubr.bf16.mxu0 0
          %2232 = vmatmul.mubr.bf16.gmra.mrb[0].mxu0 %v2090
          %v2233 = vpop.f32.mrb[0].mxu0
          %v2234 = vadd.f32 %v2112, %v2233
          %v2235 = vpop.f32.mrb[0].mxu0
          %v2236 = vadd.f32 %v2116, %v2235
          %v2237 = vpop.f32.mrb[0].mxu0
          %v2238 = vpop.f32.mrb[0].mxu0
          %2239 = vdwg.mxu0
          %v2240 = vmax.f32 %v2234, 0.0
          %v2241 = vmax.f32 %v2236, 0.0
          %2242 = vst [vmem:[#allocation36] sm:$0xff] %v1742
          %2243 = vst [vmem:[#allocation37] sm:$0xff] %v1853
          %v2244 = vpack.c.bf16 %v2240, %v2240
          %v2245 = vpack.c.bf16 %v2241, %v2241
          %v2248 = vunpack.c.l.b16 %v2244
          %v2249 = vunpack.c.l.b16 %v2245
          %v2250 = vpack.c.b16 %v2249, %v2248
          %2252 = vst [vmem:[#allocation3] sm:$0xff] %v2250
        $region204: #{tpu_custom_call.1} parent=111 // pred_fallthru
          _
        %p2253 = scmp.ge.s32.totalorder %s56, 2
        // Predicated region
        $region205: #{tpu_custom_call.1} parent=111 // pred_check
          %p2254 = pneg %p2253
        $region206: #{tpu_custom_call.1} parent=111 // pred_check_branch
          %2256 = sbr.rel (%p2254) target = $region208
        $region207: #{tpu_custom_call.1} parent=111 // pred_region
          %v2257 = vld [vmem:[#allocation3] sm:$0xff]
          %v2258 = vld [vmem:[%s1048] sm:$0xf]
          %v2259 = vld [vmem:[%s1048 + $0x4] sm:$0xf]
          %v2260 = vld [vmem:[%s1048 + $0x8] sm:$0xf]
          %v2261 = vld [vmem:[%s1048 + $0xc] sm:$0xf]
          %v2262 = vld [vmem:[%s1048 + $0x10] sm:$0xf]
          %v2263 = vld [vmem:[%s1048 + $0x14] sm:$0xf]
          %v2264 = vld [vmem:[%s1048 + $0x18] sm:$0xf]
          %v2265 = vld [vmem:[%s1048 + $0x1c] sm:$0xf]
          %v2266 = vld [vmem:[%s1048 + $0x20] sm:$0xf]
          %v2267 = vld [vmem:[%s1048 + $0x24] sm:$0xf]
          %v2268 = vld [vmem:[%s1048 + $0x28] sm:$0xf]
          %v2269 = vld [vmem:[%s1048 + $0x2c] sm:$0xf]
          %v2270 = vld [vmem:[%s1048 + $0x30] sm:$0xf]
          %v2271 = vld [vmem:[%s1048 + $0x34] sm:$0xf]
          %v2272 = vld [vmem:[%s1048 + $0x38] sm:$0xf]
          %v2273 = vld [vmem:[%s1048 + $0x3c] sm:$0xf]
          %v2274 = vld [vmem:[%s1048 + $0x40] sm:$0xf]
          %v2275 = vld [vmem:[%s1048 + $0x44] sm:$0xf]
          %v2276 = vld [vmem:[%s1048 + $0x48] sm:$0xf]
          %v2277 = vld [vmem:[%s1048 + $0x4c] sm:$0xf]
          %v2278 = vld [vmem:[%s1048 + $0x50] sm:$0xf]
          %v2279 = vld [vmem:[%s1048 + $0x54] sm:$0xf]
          %v2280 = vld [vmem:[%s1048 + $0x58] sm:$0xf]
          %v2281 = vld [vmem:[%s1048 + $0x5c] sm:$0xf]
          %v2282 = vld [vmem:[%s1048 + $0x60] sm:$0xf]
          %v2283 = vld [vmem:[%s1048 + $0x64] sm:$0xf]
          %v2284 = vld [vmem:[%s1048 + $0x68] sm:$0xf]
          %v2285 = vld [vmem:[%s1048 + $0x6c] sm:$0xf]
          %v2286 = vld [vmem:[%s1048 + $0x70] sm:$0xf]
          %v2287 = vld [vmem:[%s1048 + $0x74] sm:$0xf]
          %v2288 = vld [vmem:[%s1048 + $0x78] sm:$0xf]
          %v2289 = vld [vmem:[%s1048 + $0x7c] sm:$0xf]
          %v2290 = vld [vmem:[%s1144] sm:$0x1]
          %v2292 = vlaneseq
          %v2293 = vshrl.u32 %v2292, 7
          %v2294 = vsub.s32 0, %v2293
          %v2295 = vrot.slane %v2290, %v2294
          %v2298 = vunpack.c.l.b16 %v2257
          %v2299 = vunpack.c.h.b16 %v2257
          %v2300 = vpack.c.b16 %v2298, %v2298
          %v2301 = vpack.c.b16 %v2299, %v2299
          %v2336 = vunpack.c.l.b16 %v2258
          %v2337 = vunpack.c.l.b16 %v2259
          %v2338 = vunpack.c.l.b16 %v2260
          %v2339 = vunpack.c.l.b16 %v2261
          %v2340 = vunpack.c.l.b16 %v2262
          %v2341 = vunpack.c.l.b16 %v2263
          %v2342 = vunpack.c.l.b16 %v2264
          %v2343 = vunpack.c.l.b16 %v2265
          %v2344 = vunpack.c.l.b16 %v2266
          %v2345 = vunpack.c.l.b16 %v2267
          %v2346 = vunpack.c.l.b16 %v2268
          %v2347 = vunpack.c.l.b16 %v2269
          %v2348 = vunpack.c.l.b16 %v2270
          %v2349 = vunpack.c.l.b16 %v2271
          %v2350 = vunpack.c.l.b16 %v2272
          %v2351 = vunpack.c.l.b16 %v2273
          %v2352 = vunpack.c.l.b16 %v2274
          %v2353 = vunpack.c.l.b16 %v2275
          %v2354 = vunpack.c.l.b16 %v2276
          %v2355 = vunpack.c.l.b16 %v2277
          %v2356 = vunpack.c.l.b16 %v2278
          %v2357 = vunpack.c.l.b16 %v2279
          %v2358 = vunpack.c.l.b16 %v2280
          %v2359 = vunpack.c.l.b16 %v2281
          %v2360 = vunpack.c.l.b16 %v2282
          %v2361 = vunpack.c.l.b16 %v2283
          %v2362 = vunpack.c.l.b16 %v2284
          %v2363 = vunpack.c.l.b16 %v2285
          %v2364 = vunpack.c.l.b16 %v2286
          %v2365 = vunpack.c.l.b16 %v2287
          %v2366 = vunpack.c.l.b16 %v2288
          %v2367 = vunpack.c.l.b16 %v2289
          %v2368 = vpack.c.b16 %v2337, %v2336
          %v2369 = vpack.c.b16 %v2339, %v2338
          %v2370 = vpack.c.b16 %v2341, %v2340
          %v2371 = vpack.c.b16 %v2343, %v2342
          %v2372 = vpack.c.b16 %v2345, %v2344
          %v2373 = vpack.c.b16 %v2347, %v2346
          %v2374 = vpack.c.b16 %v2349, %v2348
          %v2375 = vpack.c.b16 %v2351, %v2350
          %v2376 = vpack.c.b16 %v2353, %v2352
          %v2377 = vpack.c.b16 %v2355, %v2354
          %v2378 = vpack.c.b16 %v2357, %v2356
          %v2379 = vpack.c.b16 %v2359, %v2358
          %v2380 = vpack.c.b16 %v2361, %v2360
          %v2381 = vpack.c.b16 %v2363, %v2362
          %v2382 = vpack.c.b16 %v2365, %v2364
          %v2383 = vpack.c.b16 %v2367, %v2366
          %2400 = vmatprep.subr.bf16.mxu0 0
          %2401 = vmatpush1.bf16.msra.mxu0 %v2368
          %2402 = vmatprep.subr.bf16.mxu0 0
          %2403 = vmatpush1.bf16.msra.mxu0 %v2369
          %2404 = vmatprep.subr.bf16.mxu0 0
          %2405 = vmatpush1.bf16.msra.mxu0 %v2370
          %2406 = vmatprep.subr.bf16.mxu0 0
          %2407 = vmatpush1.bf16.msra.mxu0 %v2371
          %2408 = vmatprep.subr.bf16.mxu0 0
          %2409 = vmatpush1.bf16.msra.mxu0 %v2372
          %2410 = vmatprep.subr.bf16.mxu0 0
          %2411 = vmatpush1.bf16.msra.mxu0 %v2373
          %2412 = vmatprep.subr.bf16.mxu0 0
          %2413 = vmatpush1.bf16.msra.mxu0 %v2374
          %2414 = vmatprep.subr.bf16.mxu0 0
          %2415 = vmatpush1.bf16.msra.mxu0 %v2375
          %2416 = vmatprep.subr.bf16.mxu0 0
          %2417 = vmatpush1.bf16.msra.mxu0 %v2376
          %2418 = vmatprep.subr.bf16.mxu0 0
          %2419 = vmatpush1.bf16.msra.mxu0 %v2377
          %2420 = vmatprep.subr.bf16.mxu0 0
          %2421 = vmatpush1.bf16.msra.mxu0 %v2378
          %2422 = vmatprep.subr.bf16.mxu0 0
          %2423 = vmatpush1.bf16.msra.mxu0 %v2379
          %2424 = vmatprep.subr.bf16.mxu0 0
          %2425 = vmatpush1.bf16.msra.mxu0 %v2380
          %2426 = vmatprep.subr.bf16.mxu0 0
          %2427 = vmatpush1.bf16.msra.mxu0 %v2381
          %2428 = vmatprep.subr.bf16.mxu0 0
          %2429 = vmatpush1.bf16.msra.mxu0 %v2382
          %2430 = vmatprep.subr.bf16.mxu0 0
          %2431 = vmatpush1.bf16.msra.mxu0 %v2383
          %2432 = vmatprep.mubr.bf16.mxu0 %v2301
          %2433 = vmatmul.mubr.bf16.gmra.mrb[0].mxu0 %v2300
          %v2434 = vpop.f32.mrb[0].mxu0
          %v2435 = vadd.f32 %v2295, %v2434
          %v2436 = vpop.f32.mrb[0].mxu0
          %v2437 = vpop.f32.mrb[0].mxu0
          %v2438 = vpop.f32.mrb[0].mxu0
          %2439 = vdwg.mxu0
          %v2440 = vxor.u32 %v2435, 2147483648
          %v2441 = vmul.f32 %v2440, 1.442695
          %v2442 = vpow.pop %v2441
          %v2443 = vadd.f32 %v2442, 1.0
          %v2444 = vrcp.pop %v2443
          %v2445 = vmul.f32 1.0, %v2444
          %2446 = vst [vmem:[%s1130] sm:$0xff] %v2445
        $region208: #{tpu_custom_call.1} parent=111 // pred_fallthru
          _
        %s2447 = sand.u32 %s56, 1
        %s2448 = scalar_lea.sflag [#allocation6], %s2447
        %s2449 = sand.u32 %s635, 1
        %s2450 = smul.addr %s2449, 8
        %s2451 = scalar_lea.vmem [#allocation39], %s2450
        // Predicated region
        $region209: #{tpu_custom_call.1} parent=111 // pred_check
          %p2452 = pneg %p592
        $region210: #{tpu_custom_call.1} parent=111 // pred_check_branch
          %2454 = sbr.rel (%p2452) target = $region212
        $region211: #{tpu_custom_call.1} parent=111 // pred_region
          %s2456 = ssub.s32 128, 128
          %2457 = vsyncadd [#allocation6], %s2456
          %s2459 = sshll.u32 [#allocation36], 4
          %s2460 = int_to_ptr.vmem [resolvable:$true] %s2459
          %2462 = dma.vmem_to_hbm [thread:$0]  %s2460, 128, %s23, [#allocation6]
        $region212: #{tpu_custom_call.1} parent=111 // pred_fallthru
          _
        // Predicated region
        $region213: #{tpu_custom_call.1} parent=111 // pred_check
          %p2463 = pneg %p613
        $region214: #{tpu_custom_call.1} parent=111 // pred_check_branch
          %2465 = sbr.rel (%p2463) target = $region216
        $region215: #{tpu_custom_call.1} parent=111 // pred_region
          %s2467 = ssub.s32 128, 128
          %2468 = vsyncadd [#allocation38], %s2467
          %s2470 = sshll.u32 [#allocation37], 4
          %s2471 = int_to_ptr.vmem [resolvable:$true] %s2470
          %2473 = dma.vmem_to_hbm [thread:$0]  %s2471, 128, %s24, [#allocation38]
        $region216: #{tpu_custom_call.1} parent=111 // pred_fallthru
          _
        // Predicated region
        $region217: #{tpu_custom_call.1} parent=111 // pred_check
          %p2474 = pneg %p645
        $region218: #{tpu_custom_call.1} parent=111 // pred_check_branch
          %2476 = sbr.rel (%p2474) target = $region220
        $region219: #{tpu_custom_call.1} parent=111 // pred_region
          %s2477 = ssub.s32 %s56, 2
          %p2478 = scmp.gt.s32.totalorder %s2477, 0
          %s2479 = scalar_select %p2478, %s2477, 0
          %s2481 = ssub.s32 128, 128
          %2482 = vsyncadd %s2448, %s2481
          %s2483 = smul.addr %s2479, 128
          %s2484 = scalar_lea.hbm %s25, %s2483
          %s2486 = sshll.u32 %s2451, 4
          %s2487 = int_to_ptr.vmem [resolvable:$true] %s2486
          %2489 = dma.vmem_to_hbm [thread:$0]  %s2487, 128, %s2484, %s2448
        $region220: #{tpu_custom_call.1} parent=111 // pred_fallthru
          _
        // Predicated region
        $region221: #{tpu_custom_call.1} parent=111 // pred_check
          %p2490 = pneg %p592
        $region222: #{tpu_custom_call.1} parent=111 // pred_check_branch
          %2492 = sbr.rel (%p2490) target = $region224
        $region223: #{tpu_custom_call.1} parent=111 // pred_region
          %2493 = dma.done [#allocation6], 128
        $region224: #{tpu_custom_call.1} parent=111 // pred_fallthru
          _
        // Predicated region
        $region225: #{tpu_custom_call.1} parent=111 // pred_check
          %p2494 = pneg %p613
        $region226: #{tpu_custom_call.1} parent=111 // pred_check_branch
          %2496 = sbr.rel (%p2494) target = $region228
        $region227: #{tpu_custom_call.1} parent=111 // pred_region
          %2497 = dma.done [#allocation38], 128
        $region228: #{tpu_custom_call.1} parent=111 // pred_fallthru
          _
      $region112: #{tpu_custom_call.1} parent=5 // pred_fallthru
        _
      %p2498 = scmp.le.s32.totalorder 2, %s51
      // Predicated region
      $region229: #{tpu_custom_call.1} parent=5 // pred_check
        %p2499 = pneg %p2498
      $region230: #{tpu_custom_call.1} parent=5 // pred_check_branch
        %2501 = sbr.rel (%p2499) target = $region232
      $region231: #{tpu_custom_call.1} parent=5 // pred_region
        %s2502 = ssub.s32 %s51, 2
        // Predicated region
        $region233: #{tpu_custom_call.1} parent=231 // pred_check
          %p2503 = pneg %p651
        $region234: #{tpu_custom_call.1} parent=231 // pred_check_branch
          %2505 = sbr.rel (%p2503) target = $region236
        $region235: #{tpu_custom_call.1} parent=231 // pred_region
          %s2506 = sand.u32 %s57, 1
          %s2507 = scalar_lea.sflag [#allocation6], %s2506
          %s2508 = sand.u32 %s636, 1
          %s2509 = smul.addr %s2508, 8
          %s2510 = scalar_lea.vmem [#allocation39], %s2509
          %2511 = dma.done %s2507, 128
        $region236: #{tpu_custom_call.1} parent=231 // pred_fallthru
          _
      $region232: #{tpu_custom_call.1} parent=5 // pred_fallthru
        _
    $region6: #{tpu_custom_call.1} parent=1 // loop_footer
      %s55 = sadd.s32 1, %s51
    $region7: #{tpu_custom_call.1} parent=1 // loop_footer_branch
      %50 = sbr.rel target = $region3
    $region8: #{tpu_custom_call.1} parent=1 // loop_exit
      _
    %2512 = vsyncpa [#allocation5], 1
    %s2513 = scalar_lea.sflag [#allocation5], 1
    %2514 = vsyncpa %s2513, 1
    %2515 = vsyncpa [#allocation8], 1
    %s2516 = scalar_lea.sflag [#allocation8], 1
    %2517 = vsyncpa %s2516, 1
    %2518 = vsyncpa [#allocation11], 1
    %2519 = vsyncpa [#allocation14], 1
    %2520 = vsyncpa [#allocation17], 1
    %2521 = vsyncpa [#allocation20], 1
    %2522 = vsyncpa [#allocation23], 1
    %2523 = vsyncpa [#allocation26], 1
    %2524 = vsyncpa [#allocation29], 1
    %2525 = vsyncpa [#allocation32], 1
    %2526 = vsyncpa [#allocation35], 1
    %s2527 = scalar_lea.sflag [#allocation35], 1
    %2528 = vsyncpa %s2527, 1
    %2529 = vsyncpa [#allocation6], 1
    %s2530 = scalar_lea.sflag [#allocation6], 1
    %2531 = vsyncpa %s2530, 1
    %2532 = vsyncpa [#allocation38], 1

</llo_original>
